<compile_context>
chip_gen: v5e
topology: v5e:2x2
jax: 0.10.0
libtpu: 0.0.40
codegen_flags: <defaults>
</compile_context>

<pallas_src>
import functools

import jax
import jax.numpy as jnp
import numpy as np
from jax.experimental import pallas as pl
from jax.experimental.pallas import tpu as pltpu

# Matmul-operand dtype. float32 keeps exact parity with the f32 reference used
# in the test below; on v6e/v7x set to jnp.bfloat16 to halve matmul-input bytes
# and double MXU rate (accumulation stays f32 via preferred_element_type).
_MM_DTYPE = jnp.float32


def _silu(x):
    return x * jax.nn.sigmoid(x)


def _round_up(v, m):
    return ((v + m - 1) // m) * m


# --------------------------------------------------------------------------
# Kernel 1: pointwise (1x1) conv  ->  y = act?( (x @ w) * scale + bias )
# --------------------------------------------------------------------------
def _pw_kernel(x_ref, w_ref, s_ref, b_ref, o_ref, *, act):
    x = x_ref[...].astype(_MM_DTYPE)
    w = w_ref[...].astype(_MM_DTYPE)
    y = jnp.dot(x, w, preferred_element_type=jnp.float32)
    y = y * s_ref[...] + b_ref[...]
    if act:
        y = _silu(y)
    o_ref[...] = y.astype(o_ref.dtype)


def pointwise_conv(x_flat, w, scale, bias, *, act, block_m=512):
    M, cin = x_flat.shape
    cout = w.shape[1]
    bm = min(block_m, M)
    grid = (pl.cdiv(M, bm),)          # ragged last block handled by Pallas
    return pl.pallas_call(
        functools.partial(_pw_kernel, act=act),
        out_shape=jax.ShapeDtypeStruct((M, cout), jnp.float32),
        grid_spec=pltpu.PrefetchScalarGridSpec(
            num_scalar_prefetch=0,
            grid=grid,
            in_specs=[
                pl.BlockSpec((bm, cin), lambda i: (i, 0)),
                pl.BlockSpec((cin, cout), lambda i: (0, 0)),
                pl.BlockSpec((1, cout), lambda i: (0, 0)),
                pl.BlockSpec((1, cout), lambda i: (0, 0)),
            ],
            out_specs=pl.BlockSpec((bm, cout), lambda i: (i, 0)),
        ),
        compiler_params=pltpu.CompilerParams(dimension_semantics=("parallel",)),
    )(x_flat, w, scale.reshape(1, cout), bias.reshape(1, cout))


# --------------------------------------------------------------------------
# Kernel 2: fused Bottleneck — two 3x3 Conv+BN+SiLU with residual add.
#           Halo padding and the h1 intermediate live entirely in VMEM.
# --------------------------------------------------------------------------
def _im2col_3x3(src_ref, H, W, c):
    """Stack the 9 shifted taps along K -> (H*W, 9*c) for a single MXU dot."""
    cols = []
    for ky in range(3):
        for kx in range(3):
            patch = src_ref[ky:ky + H, kx:kx + W, :]
            cols.append(patch.reshape(H * W, c))
    return jnp.concatenate(cols, axis=1)


def _bottleneck_kernel(x_ref, w1_ref, s1_ref, b1_ref, w2_ref, s2_ref, b2_ref,
                       o_ref, xpad_ref, h1pad_ref, *, H, W, add):
    c = x_ref.shape[3]
    HW = H * W

    # Zero-padded input tile (VMEM only — no HBM-level jnp.pad).
    xpad_ref[...] = jnp.zeros(xpad_ref.shape, xpad_ref.dtype)
    xpad_ref[1:H + 1, 1:W + 1, :] = x_ref[0].astype(xpad_ref.dtype)

    # conv1 (3x3) + BN + SiLU, one matmul with K = 9*c.
    col = _im2col_3x3(xpad_ref, H, W, c)
    h1 = jnp.dot(col, w1_ref[...].astype(_MM_DTYPE),
                 preferred_element_type=jnp.float32)
    h1 = _silu(h1 * s1_ref[...] + b1_ref[...])

    # h1 stays in VMEM, zero-padded halo for the second "same" conv.
    h1pad_ref[...] = jnp.zeros(h1pad_ref.shape, h1pad_ref.dtype)
    h1pad_ref[1:H + 1, 1:W + 1, :] = h1.reshape(H, W, c).astype(h1pad_ref.dtype)

    # conv2 (3x3) + BN + SiLU (+ residual), again one matmul with K = 9*c.
    col2 = _im2col_3x3(h1pad_ref, H, W, c)
    y = jnp.dot(col2, w2_ref[...].astype(_MM_DTYPE),
                preferred_element_type=jnp.float32)
    y = _silu(y * s2_ref[...] + b2_ref[...])
    if add:
        y = y + x_ref[0].reshape(HW, c).astype(jnp.float32)
    o_ref[...] = y.reshape(1, H, W, c).astype(o_ref.dtype)


def bottleneck_pair(x_nhwc, w1_hwio, s1, b1, w2_hwio, s2, b2, *, add):
    N, H, W, c = x_nhwc.shape
    Wp = _round_up(W + 2, 8)                    # sublane-friendly scratch width
    w1 = w1_hwio.reshape(9 * c, c)              # (ky*3+kx)*c + cin  ordering
    w2 = w2_hwio.reshape(9 * c, c)
    itemsize = jnp.dtype(_MM_DTYPE).itemsize

    # Rough working-set estimate; raise the scoped-VMEM budget only if needed.
    est = (2 * 2 * (H * W * c * 4)              # in/out blocks, double-buffered
           + 2 * 2 * (9 * c * c * 4)            # both weight mats
           + 2 * (H + 2) * Wp * c * itemsize    # xpad + h1pad scratch
           + (H * W * 9 * c) * itemsize         # im2col value in VMEM
           + (2 << 20))                         # headroom
    vmem_limit = None if est <= (32 << 20) else min(int(est), 128 << 20)

    return pl.pallas_call(
        functools.partial(_bottleneck_kernel, H=H, W=W, add=add),
        out_shape=jax.ShapeDtypeStruct((N, H, W, c), jnp.float32),
        grid_spec=pltpu.PrefetchScalarGridSpec(
            num_scalar_prefetch=0,
            grid=(N,),
            in_specs=[
                pl.BlockSpec((1, H, W, c), lambda n: (n, 0, 0, 0)),
                pl.BlockSpec((9 * c, c), lambda n: (0, 0)),
                pl.BlockSpec((1, c), lambda n: (0, 0)),
                pl.BlockSpec((1, c), lambda n: (0, 0)),
                pl.BlockSpec((9 * c, c), lambda n: (0, 0)),
                pl.BlockSpec((1, c), lambda n: (0, 0)),
                pl.BlockSpec((1, c), lambda n: (0, 0)),
            ],
            out_specs=pl.BlockSpec((1, H, W, c), lambda n: (n, 0, 0, 0)),
            scratch_shapes=[
                pltpu.VMEM((H + 2, Wp, c), _MM_DTYPE),   # zero-padded x
                pltpu.VMEM((H + 2, Wp, c), _MM_DTYPE),   # zero-padded h1
            ],
        ),
        compiler_params=pltpu.CompilerParams(
            dimension_semantics=("parallel",),
            vmem_limit_bytes=vmem_limit),
    )(x_nhwc, w1, s1.reshape(1, c), b1.reshape(1, c),
      w2, s2.reshape(1, c), b2.reshape(1, c))


# --------------------------------------------------------------------------
# Kernel 3: fused CSP tail
#   y1 = t @ w_cv3 ; y2 = x @ w_cv2 ; z = SiLU(BN(cat(y1, y2)))
#   out = SiLU(BN(z @ w_cv4))     with w_cv4 split so cat never materializes.
# --------------------------------------------------------------------------
def _csp_tail_kernel(t_ref, x_ref, w3_ref, w2_ref, w4a_ref, w4b_ref,
                     s1_ref, b1_ref, s2_ref, b2_ref, sq_ref, bq_ref, o_ref):
    t = t_ref[...].astype(_MM_DTYPE)
    x = x_ref[...].astype(_MM_DTYPE)
    y1 = jnp.dot(t, w3_ref[...].astype(_MM_DTYPE),
                 preferred_element_type=jnp.float32)
    y2 = jnp.dot(x, w2_ref[...].astype(_MM_DTYPE),
                 preferred_element_type=jnp.float32)
    z1 = _silu(y1 * s1_ref[...] + b1_ref[...]).astype(_MM_DTYPE)
    z2 = _silu(y2 * s2_ref[...] + b2_ref[...]).astype(_MM_DTYPE)
    y = (jnp.dot(z1, w4a_ref[...].astype(_MM_DTYPE),
                 preferred_element_type=jnp.float32)
         + jnp.dot(z2, w4b_ref[...].astype(_MM_DTYPE),
                   preferred_element_type=jnp.float32))
    o_ref[...] = _silu(y * sq_ref[...] + bq_ref[...]).astype(o_ref.dtype)


def csp_tail(t_flat, x_flat, w3, w2, w4, s_bn, b_bn, s4, b4, *, block_m=512):
    M, c_ = t_flat.shape
    c1 = x_flat.shape[1]
    c2 = w4.shape[1]
    bm = min(block_m, M)
    w4a, w4b = w4[:c_], w4[c_:]
    return pl.pallas_call(
        _csp_tail_kernel,
        out_shape=jax.ShapeDtypeStruct((M, c2), jnp.float32),
        grid_spec=pltpu.PrefetchScalarGridSpec(
            num_scalar_prefetch=0,
            grid=(pl.cdiv(M, bm),),
            in_specs=[
                pl.BlockSpec((bm, c_), lambda i: (i, 0)),
                pl.BlockSpec((bm, c1), lambda i: (i, 0)),
                pl.BlockSpec((c_, c_), lambda i: (0, 0)),
                pl.BlockSpec((c1, c_), lambda i: (0, 0)),
                pl.BlockSpec((c_, c2), lambda i: (0, 0)),
                pl.BlockSpec((c_, c2), lambda i: (0, 0)),
                pl.BlockSpec((1, c_), lambda i: (0, 0)),
                pl.BlockSpec((1, c_), lambda i: (0, 0)),
                pl.BlockSpec((1, c_), lambda i: (0, 0)),
                pl.BlockSpec((1, c_), lambda i: (0, 0)),
                pl.BlockSpec((1, c2), lambda i: (0, 0)),
                pl.BlockSpec((1, c2), lambda i: (0, 0)),
            ],
            out_specs=pl.BlockSpec((bm, c2), lambda i: (i, 0)),
        ),
        compiler_params=pltpu.CompilerParams(dimension_semantics=("parallel",)),
    )(t_flat, x_flat, w3, w2, w4a, w4b,
      s_bn[:c_].reshape(1, c_), b_bn[:c_].reshape(1, c_),
      s_bn[c_:].reshape(1, c_), b_bn[c_:].reshape(1, c_),
      s4.reshape(1, c2), b4.reshape(1, c2))


# --------------------------------------------------------------------------
# Parameters (deterministic synthetic init) and forward wrapper
# --------------------------------------------------------------------------
def _bn_fold(gamma, beta, mean, var, eps=1e-5):
    scale = gamma / jnp.sqrt(var + eps)
    return scale, beta - mean * scale


def init_params(key, c1, c2, n=1, shortcut=True, e=0.5):
    c_ = int(c2 * e)
    keys = list(jax.random.split(key, 16 + 8 * n))
    ki = iter(keys)

    def conv_w(shape):
        fan_in = int(np.prod(shape[:-1]))
        return (jax.random.normal(next(ki), shape, jnp.float32)
                / np.sqrt(fan_in)).astype(jnp.float32)

    def bn(c):
        k1, k2, k3, k4 = jax.random.split(next(ki), 4)
        gamma = jax.random.uniform(k1, (c,), jnp.float32, 0.5, 1.5)
        beta = jax.random.normal(k2, (c,), jnp.float32) * 0.1
        mean = jax.random.normal(k3, (c,), jnp.float32) * 0.1
        var = jax.random.uniform(k4, (c,), jnp.float32, 0.5, 1.5)
        return _bn_fold(gamma, beta, mean, var)

    p = {}
    p["w_cv1"] = conv_w((c1, c_))                 # Conv(c1, c_, 1)
    p["s_cv1"], p["b_cv1"] = bn(c_)
    p["w_cv2"] = conv_w((c1, c_))                 # raw Conv2d(c1, c_, 1)
    p["w_cv3"] = conv_w((c_, c_))                 # raw Conv2d(c_, c_, 1)
    p["w_cv4"] = conv_w((2 * c_, c2))             # Conv(2*c_, c2, 1)
    p["s_cv4"], p["b_cv4"] = bn(c2)
    p["s_bn"], p["b_bn"] = bn(2 * c_)             # BatchNorm2d(2*c_)
    p["bottlenecks"] = []
    for _ in range(n):                            # Bottleneck(c_, c_, e=1.0)
        bp = {}
        bp["w1"] = conv_w((3, 3, c_, c_))         # HWIO
        bp["s1"], bp["b1"] = bn(c_)
        bp["w2"] = conv_w((3, 3, c_, c_))
        bp["s2"], bp["b2"] = bn(c_)
        bp["add"] = bool(shortcut)                # c_ == c_ always
        p["bottlenecks"].append(bp)
    return p


def bottleneck_csp_forward(x_nchw, params):
    N, C1, H, W = x_nchw.shape
    x = jnp.transpose(x_nchw, (0, 2, 3, 1)).astype(jnp.float32)   # NHWC
    M = N * H * W
    x_flat = x.reshape(M, C1)
    c_ = params["w_cv1"].shape[1]

    # cv1: 1x1 conv + BN + SiLU
    a_flat = pointwise_conv(x_flat, params["w_cv1"],
                            params["s_cv1"], params["b_cv1"], act=True)
    t = a_flat.reshape(N, H, W, c_)

    # m: n x Bottleneck(c_, c_, shortcut, e=1.0), both 3x3 convs fused per call
    for bp in params["bottlenecks"]:
        t = bottleneck_pair(t, bp["w1"], bp["s1"], bp["b1"],
                            bp["w2"], bp["s2"], bp["b2"], add=bp["add"])

    # cv3 + cv2 + BN(cat) + SiLU + cv4 + BN + SiLU, fully fused
    out_flat = csp_tail(t.reshape(M, c_), x_flat,
                        params["w_cv3"], params["w_cv2"], params["w_cv4"],
                        params["s_bn"], params["b_bn"],
                        params["s_cv4"], params["b_cv4"])
    c2 = params["w_cv4"].shape[1]
    out = out_flat.reshape(N, H, W, c2)
    return jnp.transpose(out, (0, 3, 1, 2))                      # back to NCHW


# --------------------------------------------------------------------------
# Pure-JAX reference (same math) for correctness check
# --------------------------------------------------------------------------
def reference_forward(x_nchw, params):
    x = jnp.transpose(x_nchw, (0, 2, 3, 1)).astype(jnp.float32)

    def pw(v, w):
        return jnp.einsum("nhwc,cd->nhwd", v, w)

    def conv3(v, w):
        return jax.lax.conv_general_dilated(
            v, w, (1, 1), "SAME",
            dimension_numbers=("NHWC", "HWIO", "NHWC"))

    a = _silu(pw(x, params["w_cv1"]) * params["s_cv1"] + params["b_cv1"])
    t = a
    for bp in params["bottlenecks"]:
        h1 = _silu(conv3(t, bp["w1"]) * bp["s1"] + bp["b1"])
        h2 = _silu(conv3(h1, bp["w2"]) * bp["s2"] + bp["b2"])
        t = t + h2 if bp["add"] else h2
    y1 = pw(t, params["w_cv3"])
    y2 = pw(x, params["w_cv2"])
    cat = jnp.concatenate([y1, y2], axis=-1)
    z = _silu(cat * params["s_bn"] + params["b_bn"])
    out = _silu(pw(z, params["w_cv4"]) * params["s_cv4"] + params["b_cv4"])
    return jnp.transpose(out, (0, 3, 1, 2))


if __name__ == "__main__":
    key = jax.random.PRNGKey(0)
    kx, kp = jax.random.split(key)
    c1 = c2 = 4
    x = jax.random.normal(kx, (2, c1, 16, 16), jnp.float32)      # NCHW like PyTorch
    params = init_params(kp, c1, c2, n=1, shortcut=True, e=0.5)

    out = bottleneck_csp_forward(x, params)
    out = jax.block_until_ready(out)

    ref = reference_forward(x, params)
    np.testing.assert_allclose(np.asarray(out), np.asarray(ref),
                               rtol=1e-4, atol=1e-4)
    print("KERNEL_OK")
</pallas_src>

<mosaic_0001>
module attributes {stable_mosaic.version = 11 : i64} {
  func.func @_pw_kernel(%arg0: i32, %arg1: memref<512x4xf32, #tpu.memory_space<vmem>>, %arg2: memref<4x2xf32, #tpu.memory_space<vmem>>, %arg3: memref<1x2xf32, #tpu.memory_space<vmem>>, %arg4: memref<1x2xf32, #tpu.memory_space<vmem>>, %arg5: memref<512x2xf32, #tpu.memory_space<vmem>>) attributes {dimension_semantics = [#tpu.dimension_semantics<parallel>], iteration_bounds = array<i64: 1>, scalar_prefetch = 0 : i64, scratch_operands = 0 : i64, tpu.core_type = #tpu.core_type<tc>, window_params = [{transform_indices = @transform_0, window_bounds = array<i64: 512, 4>}, {pipeline_mode = #tpu.pipeline_mode<synchronous>, transform_indices = @transform_1, window_bounds = array<i64: 4, 2>}, {pipeline_mode = #tpu.pipeline_mode<synchronous>, transform_indices = @transform_2, window_bounds = array<i64: 1, 2>}, {pipeline_mode = #tpu.pipeline_mode<synchronous>, transform_indices = @transform_3, window_bounds = array<i64: 1, 2>}, {transform_indices = @transform_4, window_bounds = array<i64: 512, 2>}]} {
    %c0 = arith.constant 0 : index
    %c0_0 = arith.constant 0 : index
    %0 = vector.load %arg1[%c0, %c0_0] : memref<512x4xf32, #tpu.memory_space<vmem>>, vector<512x4xf32>
    %c0_1 = arith.constant 0 : index
    %c0_2 = arith.constant 0 : index
    %1 = vector.load %arg2[%c0_1, %c0_2] : memref<4x2xf32, #tpu.memory_space<vmem>>, vector<4x2xf32>
    %cst = arith.constant dense<0.000000e+00> : vector<512x2xf32>
    %2 = tpu.matmul %0, %1, %cst {dimension_numbers = #tpu.dot_dimension_numbers<[1], [0], [0], [1], [0, 0, 1, 1], [], []>} : vector<512x4xf32>, vector<4x2xf32>, vector<512x2xf32> -> vector<512x2xf32>
    %c0_3 = arith.constant 0 : index
    %c0_4 = arith.constant 0 : index
    %3 = vector.load %arg3[%c0_3, %c0_4] : memref<1x2xf32, #tpu.memory_space<vmem>>, vector<1x2xf32>
    %4 = vector.broadcast %3 : vector<1x2xf32> to vector<512x2xf32>
    %5 = arith.mulf %2, %4 : vector<512x2xf32>
    %c0_5 = arith.constant 0 : index
    %c0_6 = arith.constant 0 : index
    %6 = vector.load %arg4[%c0_5, %c0_6] : memref<1x2xf32, #tpu.memory_space<vmem>>, vector<1x2xf32>
    %7 = vector.broadcast %6 : vector<1x2xf32> to vector<512x2xf32>
    %8 = arith.addf %5, %7 : vector<512x2xf32>
    %9 = arith.negf %8 : vector<512x2xf32>
    %10 = math.exp %9 : vector<512x2xf32>
    %cst_7 = arith.constant 1.000000e+00 : f32
    %11 = vector.broadcast %cst_7 : f32 to vector<512x2xf32>
    %12 = arith.addf %11, %10 : vector<512x2xf32>
    %13 = arith.divf %11, %12 : vector<512x2xf32>
    %14 = arith.mulf %8, %13 : vector<512x2xf32>
    %c0_8 = arith.constant 0 : index
    %c0_9 = arith.constant 0 : index
    %15 = vector.load %arg5[%c0_8, %c0_9] : memref<512x2xf32, #tpu.memory_space<vmem>>, vector<512x2xf32>
    tpu.vector_store %arg5[%c0_8, %c0_9], %14 {strides = array<i32>} : memref<512x2xf32, #tpu.memory_space<vmem>>, vector<512x2xf32>,
    return
  }
  func.func @transform_0(%arg0: i32) -> (i32, i32) {
    %c0_i32 = arith.constant 0 : i32
    %c0_i32_0 = arith.constant 0 : i32
    return %arg0, %c0_i32 : i32, i32
  }
  func.func @transform_1(%arg0: i32) -> (i32, i32) {
    %c0_i32 = arith.constant 0 : i32
    %c0_i32_0 = arith.constant 0 : i32
    %c0_i32_1 = arith.constant 0 : i32
    return %c0_i32, %c0_i32_0 : i32, i32
  }
  func.func @transform_2(%arg0: i32) -> (i32, i32) {
    %c0_i32 = arith.constant 0 : i32
    %c0_i32_0 = arith.constant 0 : i32
    %c0_i32_1 = arith.constant 0 : i32
    return %c0_i32, %c0_i32_0 : i32, i32
  }
  func.func @transform_3(%arg0: i32) -> (i32, i32) {
    %c0_i32 = arith.constant 0 : i32
    %c0_i32_0 = arith.constant 0 : i32
    %c0_i32_1 = arith.constant 0 : i32
    return %c0_i32, %c0_i32_0 : i32, i32
  }
  func.func @transform_4(%arg0: i32) -> (i32, i32) {
    %c0_i32 = arith.constant 0 : i32
    %c0_i32_0 = arith.constant 0 : i32
    return %arg0, %c0_i32 : i32, i32
  }
}

</mosaic_0001>

<llo_original>
// kernel: tpu_custom_call.1
$region0: #{tpu_custom_call.1}
  #allocation0 [shape = 'u32[]', space=smem, size = 0x4, offset = 0x4, fixed_abs, tag = 'smem constant byte address 0x4 - core index']
  #allocation1 [shape = 'u32[72,128]{1,0:T(1,128)}', space=vmem, size = 0x9000, scoped, tag = 'internal scratch']
  %s0 = inlined_call_operand.vmem [shape: f32[512,4], index: 0, kind: input, shape index: {}]
  %s1 = inlined_call_operand.vmem [shape: f32[4,2], index: 1, kind: input, shape index: {}]
  %s2 = inlined_call_operand.vmem [shape: f32[1,2], index: 2, kind: input, shape index: {}]
  %s3 = inlined_call_operand.vmem [shape: f32[1,2], index: 3, kind: input, shape index: {}]
  %s4 = inlined_call_operand.vmem [shape: f32[512,2], index: 4, kind: output, shape index: {}]
  %s5 = sld [smem:[#allocation0]]
  $region26: #{tpu_custom_call.1} parent=0
    _
  %s7 = ssub.s32 1, %s5
  %s8 = scalar_select 0, %s7, %s5
  // Predicated region
  $region2: #{tpu_custom_call.1} parent=0 // pred_check
    _
  $region3: #{tpu_custom_call.1} parent=0 // pred_check_branch
    %10 = sbr.rel (0) target = $region5
  $region4: #{tpu_custom_call.1} parent=0 // pred_region
    _
  $region5: #{tpu_custom_call.1} parent=0 // pred_fallthru
    _
  // Predicated region
  $region6: #{tpu_custom_call.1} parent=0 // pred_check
    _
  $region7: #{tpu_custom_call.1} parent=0 // pred_check_branch
    %12 = sbr.rel (0) target = $region9
  $region8: #{tpu_custom_call.1} parent=0 // pred_region
    _
  $region9: #{tpu_custom_call.1} parent=0 // pred_fallthru
    _
  // Predicated region
  $region10: #{tpu_custom_call.1} parent=0 // pred_check
    _
  $region11: #{tpu_custom_call.1} parent=0 // pred_check_branch
    %14 = sbr.rel (0) target = $region13
  $region12: #{tpu_custom_call.1} parent=0 // pred_region
    _
  $region13: #{tpu_custom_call.1} parent=0 // pred_fallthru
    _
  // Predicated region
  $region14: #{tpu_custom_call.1} parent=0 // pred_check
    _
  $region15: #{tpu_custom_call.1} parent=0 // pred_check_branch
    %16 = sbr.rel (0) target = $region17
  $region16: #{tpu_custom_call.1} parent=0 // pred_region
    _
  $region17: #{tpu_custom_call.1} parent=0 // pred_fallthru
    _
  %v17 = vld [vmem:[%s0] sm:$0xff]
  %v18 = vld [vmem:[%s0 + $0x8] sm:$0xff]
  %v19 = vld [vmem:[%s0 + $0x10] sm:$0xff]
  %v20 = vld [vmem:[%s0 + $0x18] sm:$0xff]
  %v21 = vld [vmem:[%s0 + $0x20] sm:$0xff]
  %v22 = vld [vmem:[%s0 + $0x28] sm:$0xff]
  %v23 = vld [vmem:[%s0 + $0x30] sm:$0xff]
  %v24 = vld [vmem:[%s0 + $0x38] sm:$0xff]
  %v25 = vld [vmem:[%s0 + $0x40] sm:$0xff]
  %v26 = vld [vmem:[%s0 + $0x48] sm:$0xff]
  %v27 = vld [vmem:[%s0 + $0x50] sm:$0xff]
  %v28 = vld [vmem:[%s0 + $0x58] sm:$0xff]
  %v29 = vld [vmem:[%s0 + $0x60] sm:$0xff]
  %v30 = vld [vmem:[%s0 + $0x68] sm:$0xff]
  %v31 = vld [vmem:[%s0 + $0x70] sm:$0xff]
  %v32 = vld [vmem:[%s0 + $0x78] sm:$0xff]
  %v33 = vld [vmem:[%s0 + $0x80] sm:$0xff]
  %v34 = vld [vmem:[%s0 + $0x88] sm:$0xff]
  %v35 = vld [vmem:[%s0 + $0x90] sm:$0xff]
  %v36 = vld [vmem:[%s0 + $0x98] sm:$0xff]
  %v37 = vld [vmem:[%s0 + $0xa0] sm:$0xff]
  %v38 = vld [vmem:[%s0 + $0xa8] sm:$0xff]
  %v39 = vld [vmem:[%s0 + $0xb0] sm:$0xff]
  %v40 = vld [vmem:[%s0 + $0xb8] sm:$0xff]
  %v41 = vld [vmem:[%s0 + $0xc0] sm:$0xff]
  %v42 = vld [vmem:[%s0 + $0xc8] sm:$0xff]
  %v43 = vld [vmem:[%s0 + $0xd0] sm:$0xff]
  %v44 = vld [vmem:[%s0 + $0xd8] sm:$0xff]
  %v45 = vld [vmem:[%s0 + $0xe0] sm:$0xff]
  %v46 = vld [vmem:[%s0 + $0xe8] sm:$0xff]
  %v47 = vld [vmem:[%s0 + $0xf0] sm:$0xff]
  %v48 = vld [vmem:[%s0 + $0xf8] sm:$0xff]
  %v49 = vld [vmem:[%s0 + $0x100] sm:$0xff]
  %v50 = vld [vmem:[%s0 + $0x108] sm:$0xff]
  %v51 = vld [vmem:[%s0 + $0x110] sm:$0xff]
  %v52 = vld [vmem:[%s0 + $0x118] sm:$0xff]
  %v53 = vld [vmem:[%s0 + $0x120] sm:$0xff]
  %v54 = vld [vmem:[%s0 + $0x128] sm:$0xff]
  %v55 = vld [vmem:[%s0 + $0x130] sm:$0xff]
  %v56 = vld [vmem:[%s0 + $0x138] sm:$0xff]
  %v57 = vld [vmem:[%s0 + $0x140] sm:$0xff]
  %v58 = vld [vmem:[%s0 + $0x148] sm:$0xff]
  %v59 = vld [vmem:[%s0 + $0x150] sm:$0xff]
  %v60 = vld [vmem:[%s0 + $0x158] sm:$0xff]
  %v61 = vld [vmem:[%s0 + $0x160] sm:$0xff]
  %v62 = vld [vmem:[%s0 + $0x168] sm:$0xff]
  %v63 = vld [vmem:[%s0 + $0x170] sm:$0xff]
  %v64 = vld [vmem:[%s0 + $0x178] sm:$0xff]
  %v65 = vld [vmem:[%s0 + $0x180] sm:$0xff]
  %v66 = vld [vmem:[%s0 + $0x188] sm:$0xff]
  %v67 = vld [vmem:[%s0 + $0x190] sm:$0xff]
  %v68 = vld [vmem:[%s0 + $0x198] sm:$0xff]
  %v69 = vld [vmem:[%s0 + $0x1a0] sm:$0xff]
  %v70 = vld [vmem:[%s0 + $0x1a8] sm:$0xff]
  %v71 = vld [vmem:[%s0 + $0x1b0] sm:$0xff]
  %v72 = vld [vmem:[%s0 + $0x1b8] sm:$0xff]
  %v73 = vld [vmem:[%s0 + $0x1c0] sm:$0xff]
  %v74 = vld [vmem:[%s0 + $0x1c8] sm:$0xff]
  %v75 = vld [vmem:[%s0 + $0x1d0] sm:$0xff]
  %v76 = vld [vmem:[%s0 + $0x1d8] sm:$0xff]
  %v77 = vld [vmem:[%s0 + $0x1e0] sm:$0xff]
  %v78 = vld [vmem:[%s0 + $0x1e8] sm:$0xff]
  %v79 = vld [vmem:[%s0 + $0x1f0] sm:$0xff]
  %v80 = vld [vmem:[%s0 + $0x1f8] sm:$0xff]
  %v81 = vld [vmem:[%s1] sm:$0xf]
  %vm82 = vcmask 31744
  %v84 = vsel %vm82, %v17, 0
  %v87 = vsel %vm82, %v18, 0
  %v90 = vsel %vm82, %v19, 0
  %v93 = vsel %vm82, %v20, 0
  %v96 = vsel %vm82, %v21, 0
  %v99 = vsel %vm82, %v22, 0
  %v102 = vsel %vm82, %v23, 0
  %v105 = vsel %vm82, %v24, 0
  %v108 = vsel %vm82, %v25, 0
  %v111 = vsel %vm82, %v26, 0
  %v114 = vsel %vm82, %v27, 0
  %v117 = vsel %vm82, %v28, 0
  %v120 = vsel %vm82, %v29, 0
  %v123 = vsel %vm82, %v30, 0
  %v126 = vsel %vm82, %v31, 0
  %v129 = vsel %vm82, %v32, 0
  %v132 = vsel %vm82, %v33, 0
  %v135 = vsel %vm82, %v34, 0
  %v138 = vsel %vm82, %v35, 0
  %v141 = vsel %vm82, %v36, 0
  %v144 = vsel %vm82, %v37, 0
  %v147 = vsel %vm82, %v38, 0
  %v150 = vsel %vm82, %v39, 0
  %v153 = vsel %vm82, %v40, 0
  %v156 = vsel %vm82, %v41, 0
  %v159 = vsel %vm82, %v42, 0
  %v162 = vsel %vm82, %v43, 0
  %v165 = vsel %vm82, %v44, 0
  %v168 = vsel %vm82, %v45, 0
  %v171 = vsel %vm82, %v46, 0
  %v174 = vsel %vm82, %v47, 0
  %v177 = vsel %vm82, %v48, 0
  %v180 = vsel %vm82, %v49, 0
  %v183 = vsel %vm82, %v50, 0
  %v186 = vsel %vm82, %v51, 0
  %v189 = vsel %vm82, %v52, 0
  %v192 = vsel %vm82, %v53, 0
  %v195 = vsel %vm82, %v54, 0
  %v198 = vsel %vm82, %v55, 0
  %v201 = vsel %vm82, %v56, 0
  %v204 = vsel %vm82, %v57, 0
  %v207 = vsel %vm82, %v58, 0
  %v210 = vsel %vm82, %v59, 0
  %v213 = vsel %vm82, %v60, 0
  %v216 = vsel %vm82, %v61, 0
  %v219 = vsel %vm82, %v62, 0
  %v222 = vsel %vm82, %v63, 0
  %v225 = vsel %vm82, %v64, 0
  %v228 = vsel %vm82, %v65, 0
  %v231 = vsel %vm82, %v66, 0
  %v234 = vsel %vm82, %v67, 0
  %v237 = vsel %vm82, %v68, 0
  %v240 = vsel %vm82, %v69, 0
  %v243 = vsel %vm82, %v70, 0
  %v246 = vsel %vm82, %v71, 0
  %v249 = vsel %vm82, %v72, 0
  %v252 = vsel %vm82, %v73, 0
  %v255 = vsel %vm82, %v74, 0
  %v258 = vsel %vm82, %v75, 0
  %v261 = vsel %vm82, %v76, 0
  %v264 = vsel %vm82, %v77, 0
  %v267 = vsel %vm82, %v78, 0
  %v270 = vsel %vm82, %v79, 0
  %v273 = vsel %vm82, %v80, 0
  %vm275 = vcmask 1043456
  %v277 = vsel %vm275, %v81, 0
  %279 = vmatpush.msra.mxu0 0.0
  %280 = vmatpush.msra.mxu0 0.0
  %281 = vmatpush.msra.mxu0 0.0
  %282 = vmatpush.msra.mxu0 0.0
  %283 = vmatpush.msra.mxu0 0.0
  %284 = vmatpush.msra.mxu0 0.0
  %285 = vmatpush.msra.mxu0 0.0
  %286 = vmatpush.msra.mxu0 0.0
  %287 = vmatpush.msra.mxu0 0.0
  %288 = vmatpush.msra.mxu0 0.0
  %289 = vmatpush.msra.mxu0 0.0
  %290 = vmatpush.msra.mxu0 0.0
  %291 = vmatpush.msra.mxu0 0.0
  %292 = vmatpush.msra.mxu0 0.0
  %293 = vmatpush.msra.mxu0 0.0
  %294 = vmatpush.msra.mxu0 %v277
  %295 = vmatmul.f32.gmra.mxu0 %v84
  %v296 = vpop.f32.mrf.mxu0
  %v297 = vadd.f32 0.0, %v296
  %298 = vmatmul.f32.gmra.mxu0 %v87
  %v299 = vpop.f32.mrf.mxu0
  %v300 = vadd.f32 0.0, %v299
  %301 = vmatmul.f32.gmra.mxu0 %v90
  %v302 = vpop.f32.mrf.mxu0
  %v303 = vadd.f32 0.0, %v302
  %304 = vmatmul.f32.gmra.mxu0 %v93
  %v305 = vpop.f32.mrf.mxu0
  %v306 = vadd.f32 0.0, %v305
  %307 = vmatmul.f32.gmra.mxu0 %v96
  %v308 = vpop.f32.mrf.mxu0
  %v309 = vadd.f32 0.0, %v308
  %310 = vmatmul.f32.gmra.mxu0 %v99
  %v311 = vpop.f32.mrf.mxu0
  %v312 = vadd.f32 0.0, %v311
  %313 = vmatmul.f32.gmra.mxu0 %v102
  %v314 = vpop.f32.mrf.mxu0
  %v315 = vadd.f32 0.0, %v314
  %316 = vmatmul.f32.gmra.mxu0 %v105
  %v317 = vpop.f32.mrf.mxu0
  %v318 = vadd.f32 0.0, %v317
  %319 = vmatmul.f32.gmra.mxu0 %v108
  %v320 = vpop.f32.mrf.mxu0
  %v321 = vadd.f32 0.0, %v320
  %322 = vmatmul.f32.gmra.mxu0 %v111
  %v323 = vpop.f32.mrf.mxu0
  %v324 = vadd.f32 0.0, %v323
  %325 = vmatmul.f32.gmra.mxu0 %v114
  %v326 = vpop.f32.mrf.mxu0
  %v327 = vadd.f32 0.0, %v326
  %328 = vmatmul.f32.gmra.mxu0 %v117
  %v329 = vpop.f32.mrf.mxu0
  %v330 = vadd.f32 0.0, %v329
  %331 = vmatmul.f32.gmra.mxu0 %v120
  %v332 = vpop.f32.mrf.mxu0
  %v333 = vadd.f32 0.0, %v332
  %334 = vmatmul.f32.gmra.mxu0 %v123
  %v335 = vpop.f32.mrf.mxu0
  %v336 = vadd.f32 0.0, %v335
  %337 = vmatmul.f32.gmra.mxu0 %v126
  %v338 = vpop.f32.mrf.mxu0
  %v339 = vadd.f32 0.0, %v338
  %340 = vmatmul.f32.gmra.mxu0 %v129
  %v341 = vpop.f32.mrf.mxu0
  %v342 = vadd.f32 0.0, %v341
  %343 = vmatmul.f32.gmra.mxu0 %v132
  %v344 = vpop.f32.mrf.mxu0
  %v345 = vadd.f32 0.0, %v344
  %346 = vmatmul.f32.gmra.mxu0 %v135
  %v347 = vpop.f32.mrf.mxu0
  %v348 = vadd.f32 0.0, %v347
  %349 = vmatmul.f32.gmra.mxu0 %v138
  %v350 = vpop.f32.mrf.mxu0
  %v351 = vadd.f32 0.0, %v350
  %352 = vmatmul.f32.gmra.mxu0 %v141
  %v353 = vpop.f32.mrf.mxu0
  %v354 = vadd.f32 0.0, %v353
  %355 = vmatmul.f32.gmra.mxu0 %v144
  %v356 = vpop.f32.mrf.mxu0
  %v357 = vadd.f32 0.0, %v356
  %358 = vmatmul.f32.gmra.mxu0 %v147
  %v359 = vpop.f32.mrf.mxu0
  %v360 = vadd.f32 0.0, %v359
  %361 = vmatmul.f32.gmra.mxu0 %v150
  %v362 = vpop.f32.mrf.mxu0
  %v363 = vadd.f32 0.0, %v362
  %364 = vmatmul.f32.gmra.mxu0 %v153
  %v365 = vpop.f32.mrf.mxu0
  %v366 = vadd.f32 0.0, %v365
  %367 = vmatmul.f32.gmra.mxu0 %v156
  %v368 = vpop.f32.mrf.mxu0
  %v369 = vadd.f32 0.0, %v368
  %370 = vmatmul.f32.gmra.mxu0 %v159
  %v371 = vpop.f32.mrf.mxu0
  %v372 = vadd.f32 0.0, %v371
  %373 = vmatmul.f32.gmra.mxu0 %v162
  %v374 = vpop.f32.mrf.mxu0
  %v375 = vadd.f32 0.0, %v374
  %376 = vmatmul.f32.gmra.mxu0 %v165
  %v377 = vpop.f32.mrf.mxu0
  %v378 = vadd.f32 0.0, %v377
  %379 = vmatmul.f32.gmra.mxu0 %v168
  %v380 = vpop.f32.mrf.mxu0
  %v381 = vadd.f32 0.0, %v380
  %382 = vmatmul.f32.gmra.mxu0 %v171
  %v383 = vpop.f32.mrf.mxu0
  %v384 = vadd.f32 0.0, %v383
  %385 = vmatmul.f32.gmra.mxu0 %v174
  %v386 = vpop.f32.mrf.mxu0
  %v387 = vadd.f32 0.0, %v386
  %388 = vmatmul.f32.gmra.mxu0 %v177
  %v389 = vpop.f32.mrf.mxu0
  %v390 = vadd.f32 0.0, %v389
  %391 = vmatmul.f32.gmra.mxu0 %v180
  %v392 = vpop.f32.mrf.mxu0
  %v393 = vadd.f32 0.0, %v392
  %394 = vmatmul.f32.gmra.mxu0 %v183
  %v395 = vpop.f32.mrf.mxu0
  %v396 = vadd.f32 0.0, %v395
  %397 = vmatmul.f32.gmra.mxu0 %v186
  %v398 = vpop.f32.mrf.mxu0
  %v399 = vadd.f32 0.0, %v398
  %400 = vmatmul.f32.gmra.mxu0 %v189
  %v401 = vpop.f32.mrf.mxu0
  %v402 = vadd.f32 0.0, %v401
  %403 = vmatmul.f32.gmra.mxu0 %v192
  %v404 = vpop.f32.mrf.mxu0
  %v405 = vadd.f32 0.0, %v404
  %406 = vmatmul.f32.gmra.mxu0 %v195
  %v407 = vpop.f32.mrf.mxu0
  %v408 = vadd.f32 0.0, %v407
  %409 = vmatmul.f32.gmra.mxu0 %v198
  %v410 = vpop.f32.mrf.mxu0
  %v411 = vadd.f32 0.0, %v410
  %412 = vmatmul.f32.gmra.mxu0 %v201
  %v413 = vpop.f32.mrf.mxu0
  %v414 = vadd.f32 0.0, %v413
  %415 = vmatmul.f32.gmra.mxu0 %v204
  %v416 = vpop.f32.mrf.mxu0
  %v417 = vadd.f32 0.0, %v416
  %418 = vmatmul.f32.gmra.mxu0 %v207
  %v419 = vpop.f32.mrf.mxu0
  %v420 = vadd.f32 0.0, %v419
  %421 = vmatmul.f32.gmra.mxu0 %v210
  %v422 = vpop.f32.mrf.mxu0
  %v423 = vadd.f32 0.0, %v422
  %424 = vmatmul.f32.gmra.mxu0 %v213
  %v425 = vpop.f32.mrf.mxu0
  %v426 = vadd.f32 0.0, %v425
  %427 = vmatmul.f32.gmra.mxu0 %v216
  %v428 = vpop.f32.mrf.mxu0
  %v429 = vadd.f32 0.0, %v428
  %430 = vmatmul.f32.gmra.mxu0 %v219
  %v431 = vpop.f32.mrf.mxu0
  %v432 = vadd.f32 0.0, %v431
  %433 = vmatmul.f32.gmra.mxu0 %v222
  %v434 = vpop.f32.mrf.mxu0
  %v435 = vadd.f32 0.0, %v434
  %436 = vmatmul.f32.gmra.mxu0 %v225
  %v437 = vpop.f32.mrf.mxu0
  %v438 = vadd.f32 0.0, %v437
  %439 = vmatmul.f32.gmra.mxu0 %v228
  %v440 = vpop.f32.mrf.mxu0
  %v441 = vadd.f32 0.0, %v440
  %442 = vmatmul.f32.gmra.mxu0 %v231
  %v443 = vpop.f32.mrf.mxu0
  %v444 = vadd.f32 0.0, %v443
  %445 = vmatmul.f32.gmra.mxu0 %v234
  %v446 = vpop.f32.mrf.mxu0
  %v447 = vadd.f32 0.0, %v446
  %448 = vmatmul.f32.gmra.mxu0 %v237
  %v449 = vpop.f32.mrf.mxu0
  %v450 = vadd.f32 0.0, %v449
  %451 = vmatmul.f32.gmra.mxu0 %v240
  %v452 = vpop.f32.mrf.mxu0
  %v453 = vadd.f32 0.0, %v452
  %454 = vmatmul.f32.gmra.mxu0 %v243
  %v455 = vpop.f32.mrf.mxu0
  %v456 = vadd.f32 0.0, %v455
  %457 = vmatmul.f32.gmra.mxu0 %v246
  %v458 = vpop.f32.mrf.mxu0
  %v459 = vadd.f32 0.0, %v458
  %460 = vmatmul.f32.gmra.mxu0 %v249
  %v461 = vpop.f32.mrf.mxu0
  %v462 = vadd.f32 0.0, %v461
  %463 = vmatmul.f32.gmra.mxu0 %v252
  %v464 = vpop.f32.mrf.mxu0
  %v465 = vadd.f32 0.0, %v464
  %466 = vmatmul.f32.gmra.mxu0 %v255
  %v467 = vpop.f32.mrf.mxu0
  %v468 = vadd.f32 0.0, %v467
  %469 = vmatmul.f32.gmra.mxu0 %v258
  %v470 = vpop.f32.mrf.mxu0
  %v471 = vadd.f32 0.0, %v470
  %472 = vmatmul.f32.gmra.mxu0 %v261
  %v473 = vpop.f32.mrf.mxu0
  %v474 = vadd.f32 0.0, %v473
  %475 = vmatmul.f32.gmra.mxu0 %v264
  %v476 = vpop.f32.mrf.mxu0
  %v477 = vadd.f32 0.0, %v476
  %478 = vmatmul.f32.gmra.mxu0 %v267
  %v479 = vpop.f32.mrf.mxu0
  %v480 = vadd.f32 0.0, %v479
  %481 = vmatmul.f32.gmra.mxu0 %v270
  %v482 = vpop.f32.mrf.mxu0
  %v483 = vadd.f32 0.0, %v482
  %484 = vmatmul.f32.gmra.mxu0 %v273
  %v485 = vpop.f32.mrf.mxu0
  %v486 = vadd.f32 0.0, %v485
  %487 = vdwg.mxu0
  %v488 = vld [vmem:[%s2] sm:$0x1]
  %v490 = vperm.slane %v488, 0
  %v492 = vmul.f32 %v297, %v490
  %v493 = vmul.f32 %v300, %v490
  %v494 = vmul.f32 %v303, %v490
  %v495 = vmul.f32 %v306, %v490
  %v496 = vmul.f32 %v309, %v490
  %v497 = vmul.f32 %v312, %v490
  %v498 = vmul.f32 %v315, %v490
  %v499 = vmul.f32 %v318, %v490
  %v500 = vmul.f32 %v321, %v490
  %v501 = vmul.f32 %v324, %v490
  %v502 = vmul.f32 %v327, %v490
  %v503 = vmul.f32 %v330, %v490
  %v504 = vmul.f32 %v333, %v490
  %v505 = vmul.f32 %v336, %v490
  %v506 = vmul.f32 %v339, %v490
  %v507 = vmul.f32 %v342, %v490
  %v508 = vmul.f32 %v345, %v490
  %v509 = vmul.f32 %v348, %v490
  %v510 = vmul.f32 %v351, %v490
  %v511 = vmul.f32 %v354, %v490
  %v512 = vmul.f32 %v357, %v490
  %v513 = vmul.f32 %v360, %v490
  %v514 = vmul.f32 %v363, %v490
  %v515 = vmul.f32 %v366, %v490
  %v516 = vmul.f32 %v369, %v490
  %v517 = vmul.f32 %v372, %v490
  %v518 = vmul.f32 %v375, %v490
  %v519 = vmul.f32 %v378, %v490
  %v520 = vmul.f32 %v381, %v490
  %v521 = vmul.f32 %v384, %v490
  %v522 = vmul.f32 %v387, %v490
  %v523 = vmul.f32 %v390, %v490
  %v524 = vmul.f32 %v393, %v490
  %v525 = vmul.f32 %v396, %v490
  %v526 = vmul.f32 %v399, %v490
  %v527 = vmul.f32 %v402, %v490
  %v528 = vmul.f32 %v405, %v490
  %v529 = vmul.f32 %v408, %v490
  %v530 = vmul.f32 %v411, %v490
  %v531 = vmul.f32 %v414, %v490
  %v532 = vmul.f32 %v417, %v490
  %v533 = vmul.f32 %v420, %v490
  %v534 = vmul.f32 %v423, %v490
  %v535 = vmul.f32 %v426, %v490
  %v536 = vmul.f32 %v429, %v490
  %v537 = vmul.f32 %v432, %v490
  %v538 = vmul.f32 %v435, %v490
  %v539 = vmul.f32 %v438, %v490
  %v540 = vmul.f32 %v441, %v490
  %v541 = vmul.f32 %v444, %v490
  %v542 = vmul.f32 %v447, %v490
  %v543 = vmul.f32 %v450, %v490
  %v544 = vmul.f32 %v453, %v490
  %v545 = vmul.f32 %v456, %v490
  %v546 = vmul.f32 %v459, %v490
  %v547 = vmul.f32 %v462, %v490
  %v548 = vmul.f32 %v465, %v490
  %v549 = vmul.f32 %v468, %v490
  %v550 = vmul.f32 %v471, %v490
  %v551 = vmul.f32 %v474, %v490
  %v552 = vmul.f32 %v477, %v490
  %v553 = vmul.f32 %v480, %v490
  %v554 = vmul.f32 %v483, %v490
  %v555 = vmul.f32 %v486, %v490
  %v556 = vld [vmem:[%s3] sm:$0x1]
  %v558 = vperm.slane %v556, 0
  %v560 = vadd.f32 %v492, %v558
  %v561 = vadd.f32 %v493, %v558
  %v562 = vadd.f32 %v494, %v558
  %v563 = vadd.f32 %v495, %v558
  %v564 = vadd.f32 %v496, %v558
  %v565 = vadd.f32 %v497, %v558
  %v566 = vadd.f32 %v498, %v558
  %v567 = vadd.f32 %v499, %v558
  %v568 = vadd.f32 %v500, %v558
  %v569 = vadd.f32 %v501, %v558
  %v570 = vadd.f32 %v502, %v558
  %v571 = vadd.f32 %v503, %v558
  %v572 = vadd.f32 %v504, %v558
  %v573 = vadd.f32 %v505, %v558
  %v574 = vadd.f32 %v506, %v558
  %v575 = vadd.f32 %v507, %v558
  %v576 = vadd.f32 %v508, %v558
  %v577 = vadd.f32 %v509, %v558
  %v578 = vadd.f32 %v510, %v558
  %v579 = vadd.f32 %v511, %v558
  %v580 = vadd.f32 %v512, %v558
  %v581 = vadd.f32 %v513, %v558
  %v582 = vadd.f32 %v514, %v558
  %v583 = vadd.f32 %v515, %v558
  %v584 = vadd.f32 %v516, %v558
  %v585 = vadd.f32 %v517, %v558
  %v586 = vadd.f32 %v518, %v558
  %v587 = vadd.f32 %v519, %v558
  %v588 = vadd.f32 %v520, %v558
  %v589 = vadd.f32 %v521, %v558
  %v590 = vadd.f32 %v522, %v558
  %v591 = vadd.f32 %v523, %v558
  %v592 = vadd.f32 %v524, %v558
  %v593 = vadd.f32 %v525, %v558
  %v594 = vadd.f32 %v526, %v558
  %v595 = vadd.f32 %v527, %v558
  %v596 = vadd.f32 %v528, %v558
  %v597 = vadd.f32 %v529, %v558
  %v598 = vadd.f32 %v530, %v558
  %v599 = vadd.f32 %v531, %v558
  %v600 = vadd.f32 %v532, %v558
  %v601 = vadd.f32 %v533, %v558
  %v602 = vadd.f32 %v534, %v558
  %v603 = vadd.f32 %v535, %v558
  %v604 = vadd.f32 %v536, %v558
  %v605 = vadd.f32 %v537, %v558
  %v606 = vadd.f32 %v538, %v558
  %v607 = vadd.f32 %v539, %v558
  %v608 = vadd.f32 %v540, %v558
  %v609 = vadd.f32 %v541, %v558
  %v610 = vadd.f32 %v542, %v558
  %v611 = vadd.f32 %v543, %v558
  %v612 = vadd.f32 %v544, %v558
  %v613 = vadd.f32 %v545, %v558
  %v614 = vadd.f32 %v546, %v558
  %v615 = vadd.f32 %v547, %v558
  %v616 = vadd.f32 %v548, %v558
  %v617 = vadd.f32 %v549, %v558
  %v618 = vadd.f32 %v550, %v558
  %v619 = vadd.f32 %v551, %v558
  %v620 = vadd.f32 %v552, %v558
  %v621 = vadd.f32 %v553, %v558
  %v622 = vadd.f32 %v554, %v558
  %v623 = vadd.f32 %v555, %v558
  %v624 = vxor.u32 %v560, 2147483648
  %v625 = vxor.u32 %v561, 2147483648
  %v626 = vxor.u32 %v562, 2147483648
  %v627 = vxor.u32 %v563, 2147483648
  %v628 = vxor.u32 %v564, 2147483648
  %v629 = vxor.u32 %v565, 2147483648
  %v630 = vxor.u32 %v566, 2147483648
  %v631 = vxor.u32 %v567, 2147483648
  %v632 = vxor.u32 %v568, 2147483648
  %v633 = vxor.u32 %v569, 2147483648
  %v634 = vxor.u32 %v570, 2147483648
  %v635 = vxor.u32 %v571, 2147483648
  %v636 = vxor.u32 %v572, 2147483648
  %v637 = vxor.u32 %v573, 2147483648
  %v638 = vxor.u32 %v574, 2147483648
  %v639 = vxor.u32 %v575, 2147483648
  %v640 = vxor.u32 %v576, 2147483648
  %v641 = vxor.u32 %v577, 2147483648
  %v642 = vxor.u32 %v578, 2147483648
  %v643 = vxor.u32 %v579, 2147483648
  %v644 = vxor.u32 %v580, 2147483648
  %v645 = vxor.u32 %v581, 2147483648
  %v646 = vxor.u32 %v582, 2147483648
  %v647 = vxor.u32 %v583, 2147483648
  %v648 = vxor.u32 %v584, 2147483648
  %v649 = vxor.u32 %v585, 2147483648
  %v650 = vxor.u32 %v586, 2147483648
  %v651 = vxor.u32 %v587, 2147483648
  %v652 = vxor.u32 %v588, 2147483648
  %v653 = vxor.u32 %v589, 2147483648
  %v654 = vxor.u32 %v590, 2147483648
  %v655 = vxor.u32 %v591, 2147483648
  %v656 = vxor.u32 %v592, 2147483648
  %v657 = vxor.u32 %v593, 2147483648
  %v658 = vxor.u32 %v594, 2147483648
  %v659 = vxor.u32 %v595, 2147483648
  %v660 = vxor.u32 %v596, 2147483648
  %v661 = vxor.u32 %v597, 2147483648
  %v662 = vxor.u32 %v598, 2147483648
  %v663 = vxor.u32 %v599, 2147483648
  %v664 = vxor.u32 %v600, 2147483648
  %v665 = vxor.u32 %v601, 2147483648
  %v666 = vxor.u32 %v602, 2147483648
  %v667 = vxor.u32 %v603, 2147483648
  %v668 = vxor.u32 %v604, 2147483648
  %v669 = vxor.u32 %v605, 2147483648
  %v670 = vxor.u32 %v606, 2147483648
  %v671 = vxor.u32 %v607, 2147483648
  %v672 = vxor.u32 %v608, 2147483648
  %v673 = vxor.u32 %v609, 2147483648
  %v674 = vxor.u32 %v610, 2147483648
  %v675 = vxor.u32 %v611, 2147483648
  %v676 = vxor.u32 %v612, 2147483648
  %v677 = vxor.u32 %v613, 2147483648
  %v678 = vxor.u32 %v614, 2147483648
  %v679 = vxor.u32 %v615, 2147483648
  %v680 = vxor.u32 %v616, 2147483648
  %v681 = vxor.u32 %v617, 2147483648
  %v682 = vxor.u32 %v618, 2147483648
  %v683 = vxor.u32 %v619, 2147483648
  %v684 = vxor.u32 %v620, 2147483648
  %v685 = vxor.u32 %v621, 2147483648
  %v686 = vxor.u32 %v622, 2147483648
  %v687 = vxor.u32 %v623, 2147483648
  %v688 = vmul.f32 %v624, 1.442695
  %v689 = vpow.pop %v688
  %v690 = vmul.f32 %v625, 1.442695
  %v691 = vpow.pop %v690
  %v692 = vmul.f32 %v626, 1.442695
  %v693 = vpow.pop %v692
  %v694 = vmul.f32 %v627, 1.442695
  %v695 = vpow.pop %v694
  %v696 = vmul.f32 %v628, 1.442695
  %v697 = vpow.pop %v696
  %v698 = vmul.f32 %v629, 1.442695
  %v699 = vpow.pop %v698
  %v700 = vmul.f32 %v630, 1.442695
  %v701 = vpow.pop %v700
  %v702 = vmul.f32 %v631, 1.442695
  %v703 = vpow.pop %v702
  %v704 = vmul.f32 %v632, 1.442695
  %v705 = vpow.pop %v704
  %v706 = vmul.f32 %v633, 1.442695
  %v707 = vpow.pop %v706
  %v708 = vmul.f32 %v634, 1.442695
  %v709 = vpow.pop %v708
  %v710 = vmul.f32 %v635, 1.442695
  %v711 = vpow.pop %v710
  %v712 = vmul.f32 %v636, 1.442695
  %v713 = vpow.pop %v712
  %v714 = vmul.f32 %v637, 1.442695
  %v715 = vpow.pop %v714
  %v716 = vmul.f32 %v638, 1.442695
  %v717 = vpow.pop %v716
  %v718 = vmul.f32 %v639, 1.442695
  %v719 = vpow.pop %v718
  %v720 = vmul.f32 %v640, 1.442695
  %v721 = vpow.pop %v720
  %v722 = vmul.f32 %v641, 1.442695
  %v723 = vpow.pop %v722
  %v724 = vmul.f32 %v642, 1.442695
  %v725 = vpow.pop %v724
  %v726 = vmul.f32 %v643, 1.442695
  %v727 = vpow.pop %v726
  %v728 = vmul.f32 %v644, 1.442695
  %v729 = vpow.pop %v728
  %v730 = vmul.f32 %v645, 1.442695
  %v731 = vpow.pop %v730
  %v732 = vmul.f32 %v646, 1.442695
  %v733 = vpow.pop %v732
  %v734 = vmul.f32 %v647, 1.442695
  %v735 = vpow.pop %v734
  %v736 = vmul.f32 %v648, 1.442695
  %v737 = vpow.pop %v736
  %v738 = vmul.f32 %v649, 1.442695
  %v739 = vpow.pop %v738
  %v740 = vmul.f32 %v650, 1.442695
  %v741 = vpow.pop %v740
  %v742 = vmul.f32 %v651, 1.442695
  %v743 = vpow.pop %v742
  %v744 = vmul.f32 %v652, 1.442695
  %v745 = vpow.pop %v744
  %v746 = vmul.f32 %v653, 1.442695
  %v747 = vpow.pop %v746
  %v748 = vmul.f32 %v654, 1.442695
  %v749 = vpow.pop %v748
  %v750 = vmul.f32 %v655, 1.442695
  %v751 = vpow.pop %v750
  %v752 = vmul.f32 %v656, 1.442695
  %v753 = vpow.pop %v752
  %v754 = vmul.f32 %v657, 1.442695
  %v755 = vpow.pop %v754
  %v756 = vmul.f32 %v658, 1.442695
  %v757 = vpow.pop %v756
  %v758 = vmul.f32 %v659, 1.442695
  %v759 = vpow.pop %v758
  %v760 = vmul.f32 %v660, 1.442695
  %v761 = vpow.pop %v760
  %v762 = vmul.f32 %v661, 1.442695
  %v763 = vpow.pop %v762
  %v764 = vmul.f32 %v662, 1.442695
  %v765 = vpow.pop %v764
  %v766 = vmul.f32 %v663, 1.442695
  %v767 = vpow.pop %v766
  %v768 = vmul.f32 %v664, 1.442695
  %v769 = vpow.pop %v768
  %v770 = vmul.f32 %v665, 1.442695
  %v771 = vpow.pop %v770
  %v772 = vmul.f32 %v666, 1.442695
  %v773 = vpow.pop %v772
  %v774 = vmul.f32 %v667, 1.442695
  %v775 = vpow.pop %v774
  %v776 = vmul.f32 %v668, 1.442695
  %v777 = vpow.pop %v776
  %v778 = vmul.f32 %v669, 1.442695
  %v779 = vpow.pop %v778
  %v780 = vmul.f32 %v670, 1.442695
  %v781 = vpow.pop %v780
  %v782 = vmul.f32 %v671, 1.442695
  %v783 = vpow.pop %v782
  %v784 = vmul.f32 %v672, 1.442695
  %v785 = vpow.pop %v784
  %v786 = vmul.f32 %v673, 1.442695
  %v787 = vpow.pop %v786
  %v788 = vmul.f32 %v674, 1.442695
  %v789 = vpow.pop %v788
  %v790 = vmul.f32 %v675, 1.442695
  %v791 = vpow.pop %v790
  %v792 = vmul.f32 %v676, 1.442695
  %v793 = vpow.pop %v792
  %v794 = vmul.f32 %v677, 1.442695
  %v795 = vpow.pop %v794
  %v796 = vmul.f32 %v678, 1.442695
  %v797 = vpow.pop %v796
  %v798 = vmul.f32 %v679, 1.442695
  %v799 = vpow.pop %v798
  %v800 = vmul.f32 %v680, 1.442695
  %v801 = vpow.pop %v800
  %v802 = vmul.f32 %v681, 1.442695
  %v803 = vpow.pop %v802
  %v804 = vmul.f32 %v682, 1.442695
  %v805 = vpow.pop %v804
  %v806 = vmul.f32 %v683, 1.442695
  %v807 = vpow.pop %v806
  %v808 = vmul.f32 %v684, 1.442695
  %v809 = vpow.pop %v808
  %v810 = vmul.f32 %v685, 1.442695
  %v811 = vpow.pop %v810
  %v812 = vmul.f32 %v686, 1.442695
  %v813 = vpow.pop %v812
  %v814 = vmul.f32 %v687, 1.442695
  %v815 = vpow.pop %v814
  %v816 = vadd.f32 %v689, 1.0
  %v817 = vadd.f32 %v691, 1.0
  %v818 = vadd.f32 %v693, 1.0
  %v819 = vadd.f32 %v695, 1.0
  %v820 = vadd.f32 %v697, 1.0
  %v821 = vadd.f32 %v699, 1.0
  %v822 = vadd.f32 %v701, 1.0
  %v823 = vadd.f32 %v703, 1.0
  %v824 = vadd.f32 %v705, 1.0
  %v825 = vadd.f32 %v707, 1.0
  %v826 = vadd.f32 %v709, 1.0
  %v827 = vadd.f32 %v711, 1.0
  %v828 = vadd.f32 %v713, 1.0
  %v829 = vadd.f32 %v715, 1.0
  %v830 = vadd.f32 %v717, 1.0
  %v831 = vadd.f32 %v719, 1.0
  %v832 = vadd.f32 %v721, 1.0
  %v833 = vadd.f32 %v723, 1.0
  %v834 = vadd.f32 %v725, 1.0
  %v835 = vadd.f32 %v727, 1.0
  %v836 = vadd.f32 %v729, 1.0
  %v837 = vadd.f32 %v731, 1.0
  %v838 = vadd.f32 %v733, 1.0
  %v839 = vadd.f32 %v735, 1.0
  %v840 = vadd.f32 %v737, 1.0
  %v841 = vadd.f32 %v739, 1.0
  %v842 = vadd.f32 %v741, 1.0
  %v843 = vadd.f32 %v743, 1.0
  %v844 = vadd.f32 %v745, 1.0
  %v845 = vadd.f32 %v747, 1.0
  %v846 = vadd.f32 %v749, 1.0
  %v847 = vadd.f32 %v751, 1.0
  %v848 = vadd.f32 %v753, 1.0
  %v849 = vadd.f32 %v755, 1.0
  %v850 = vadd.f32 %v757, 1.0
  %v851 = vadd.f32 %v759, 1.0
  %v852 = vadd.f32 %v761, 1.0
  %v853 = vadd.f32 %v763, 1.0
  %v854 = vadd.f32 %v765, 1.0
  %v855 = vadd.f32 %v767, 1.0
  %v856 = vadd.f32 %v769, 1.0
  %v857 = vadd.f32 %v771, 1.0
  %v858 = vadd.f32 %v773, 1.0
  %v859 = vadd.f32 %v775, 1.0
  %v860 = vadd.f32 %v777, 1.0
  %v861 = vadd.f32 %v779, 1.0
  %v862 = vadd.f32 %v781, 1.0
  %v863 = vadd.f32 %v783, 1.0
  %v864 = vadd.f32 %v785, 1.0
  %v865 = vadd.f32 %v787, 1.0
  %v866 = vadd.f32 %v789, 1.0
  %v867 = vadd.f32 %v791, 1.0
  %v868 = vadd.f32 %v793, 1.0
  %v869 = vadd.f32 %v795, 1.0
  %v870 = vadd.f32 %v797, 1.0
  %v871 = vadd.f32 %v799, 1.0
  %v872 = vadd.f32 %v801, 1.0
  %v873 = vadd.f32 %v803, 1.0
  %v874 = vadd.f32 %v805, 1.0
  %v875 = vadd.f32 %v807, 1.0
  %v876 = vadd.f32 %v809, 1.0
  %v877 = vadd.f32 %v811, 1.0
  %v878 = vadd.f32 %v813, 1.0
  %v879 = vadd.f32 %v815, 1.0
  %v880 = vrcp.pop %v816
  %v881 = vmul.f32 %v816, %v880
  %v882 = vsub.f32 1.0, %v881
  %v883 = vmul.f32 %v880, %v882
  %v884 = vadd.f32 %v880, %v883
  %vm885 = vweird.f32 %v816
  %vm886 = vweird.f32 %v880
  %vm887 = vmor %vm885, %vm886
  %v888 = vsel %vm887, %v880, %v884
  %v889 = vand.u32 2147483647, %v816
  %vm890 = vcmp.eq.f32.partialorder %v889, 8.507059e+37
  %v891 = vand.u32 %v816, 2147483648
  %v892 = vor.u32 1.1754944e-38, %v891
  %v893 = vsel %vm890, %v892, %v888
  %v894 = vmul.f32 1.0, %v893
  %v895 = vrcp.pop %v817
  %v896 = vmul.f32 %v817, %v895
  %v897 = vsub.f32 1.0, %v896
  %v898 = vmul.f32 %v895, %v897
  %v899 = vadd.f32 %v895, %v898
  %vm900 = vweird.f32 %v817
  %vm901 = vweird.f32 %v895
  %vm902 = vmor %vm900, %vm901
  %v903 = vsel %vm902, %v895, %v899
  %v904 = vand.u32 2147483647, %v817
  %vm905 = vcmp.eq.f32.partialorder %v904, 8.507059e+37
  %v906 = vand.u32 %v817, 2147483648
  %v907 = vor.u32 1.1754944e-38, %v906
  %v908 = vsel %vm905, %v907, %v903
  %v909 = vmul.f32 1.0, %v908
  %v910 = vrcp.pop %v818
  %v911 = vmul.f32 %v818, %v910
  %v912 = vsub.f32 1.0, %v911
  %v913 = vmul.f32 %v910, %v912
  %v914 = vadd.f32 %v910, %v913
  %vm915 = vweird.f32 %v818
  %vm916 = vweird.f32 %v910
  %vm917 = vmor %vm915, %vm916
  %v918 = vsel %vm917, %v910, %v914
  %v919 = vand.u32 2147483647, %v818
  %vm920 = vcmp.eq.f32.partialorder %v919, 8.507059e+37
  %v921 = vand.u32 %v818, 2147483648
  %v922 = vor.u32 1.1754944e-38, %v921
  %v923 = vsel %vm920, %v922, %v918
  %v924 = vmul.f32 1.0, %v923
  %v925 = vrcp.pop %v819
  %v926 = vmul.f32 %v819, %v925
  %v927 = vsub.f32 1.0, %v926
  %v928 = vmul.f32 %v925, %v927
  %v929 = vadd.f32 %v925, %v928
  %vm930 = vweird.f32 %v819
  %vm931 = vweird.f32 %v925
  %vm932 = vmor %vm930, %vm931
  %v933 = vsel %vm932, %v925, %v929
  %v934 = vand.u32 2147483647, %v819
  %vm935 = vcmp.eq.f32.partialorder %v934, 8.507059e+37
  %v936 = vand.u32 %v819, 2147483648
  %v937 = vor.u32 1.1754944e-38, %v936
  %v938 = vsel %vm935, %v937, %v933
  %v939 = vmul.f32 1.0, %v938
  %v940 = vrcp.pop %v820
  %v941 = vmul.f32 %v820, %v940
  %v942 = vsub.f32 1.0, %v941
  %v943 = vmul.f32 %v940, %v942
  %v944 = vadd.f32 %v940, %v943
  %vm945 = vweird.f32 %v820
  %vm946 = vweird.f32 %v940
  %vm947 = vmor %vm945, %vm946
  %v948 = vsel %vm947, %v940, %v944
  %v949 = vand.u32 2147483647, %v820
  %vm950 = vcmp.eq.f32.partialorder %v949, 8.507059e+37
  %v951 = vand.u32 %v820, 2147483648
  %v952 = vor.u32 1.1754944e-38, %v951
  %v953 = vsel %vm950, %v952, %v948
  %v954 = vmul.f32 1.0, %v953
  %v955 = vrcp.pop %v821
  %v956 = vmul.f32 %v821, %v955
  %v957 = vsub.f32 1.0, %v956
  %v958 = vmul.f32 %v955, %v957
  %v959 = vadd.f32 %v955, %v958
  %vm960 = vweird.f32 %v821
  %vm961 = vweird.f32 %v955
  %vm962 = vmor %vm960, %vm961
  %v963 = vsel %vm962, %v955, %v959
  %v964 = vand.u32 2147483647, %v821
  %vm965 = vcmp.eq.f32.partialorder %v964, 8.507059e+37
  %v966 = vand.u32 %v821, 2147483648
  %v967 = vor.u32 1.1754944e-38, %v966
  %v968 = vsel %vm965, %v967, %v963
  %v969 = vmul.f32 1.0, %v968
  %v970 = vrcp.pop %v822
  %v971 = vmul.f32 %v822, %v970
  %v972 = vsub.f32 1.0, %v971
  %v973 = vmul.f32 %v970, %v972
  %v974 = vadd.f32 %v970, %v973
  %vm975 = vweird.f32 %v822
  %vm976 = vweird.f32 %v970
  %vm977 = vmor %vm975, %vm976
  %v978 = vsel %vm977, %v970, %v974
  %v979 = vand.u32 2147483647, %v822
  %vm980 = vcmp.eq.f32.partialorder %v979, 8.507059e+37
  %v981 = vand.u32 %v822, 2147483648
  %v982 = vor.u32 1.1754944e-38, %v981
  %v983 = vsel %vm980, %v982, %v978
  %v984 = vmul.f32 1.0, %v983
  %v985 = vrcp.pop %v823
  %v986 = vmul.f32 %v823, %v985
  %v987 = vsub.f32 1.0, %v986
  %v988 = vmul.f32 %v985, %v987
  %v989 = vadd.f32 %v985, %v988
  %vm990 = vweird.f32 %v823
  %vm991 = vweird.f32 %v985
  %vm992 = vmor %vm990, %vm991
  %v993 = vsel %vm992, %v985, %v989
  %v994 = vand.u32 2147483647, %v823
  %vm995 = vcmp.eq.f32.partialorder %v994, 8.507059e+37
  %v996 = vand.u32 %v823, 2147483648
  %v997 = vor.u32 1.1754944e-38, %v996
  %v998 = vsel %vm995, %v997, %v993
  %v999 = vmul.f32 1.0, %v998
  %v1000 = vrcp.pop %v824
  %v1001 = vmul.f32 %v824, %v1000
  %v1002 = vsub.f32 1.0, %v1001
  %v1003 = vmul.f32 %v1000, %v1002
  %v1004 = vadd.f32 %v1000, %v1003
  %vm1005 = vweird.f32 %v824
  %vm1006 = vweird.f32 %v1000
  %vm1007 = vmor %vm1005, %vm1006
  %v1008 = vsel %vm1007, %v1000, %v1004
  %v1009 = vand.u32 2147483647, %v824
  %vm1010 = vcmp.eq.f32.partialorder %v1009, 8.507059e+37
  %v1011 = vand.u32 %v824, 2147483648
  %v1012 = vor.u32 1.1754944e-38, %v1011
  %v1013 = vsel %vm1010, %v1012, %v1008
  %v1014 = vmul.f32 1.0, %v1013
  %v1015 = vrcp.pop %v825
  %v1016 = vmul.f32 %v825, %v1015
  %v1017 = vsub.f32 1.0, %v1016
  %v1018 = vmul.f32 %v1015, %v1017
  %v1019 = vadd.f32 %v1015, %v1018
  %vm1020 = vweird.f32 %v825
  %vm1021 = vweird.f32 %v1015
  %vm1022 = vmor %vm1020, %vm1021
  %v1023 = vsel %vm1022, %v1015, %v1019
  %v1024 = vand.u32 2147483647, %v825
  %vm1025 = vcmp.eq.f32.partialorder %v1024, 8.507059e+37
  %v1026 = vand.u32 %v825, 2147483648
  %v1027 = vor.u32 1.1754944e-38, %v1026
  %v1028 = vsel %vm1025, %v1027, %v1023
  %v1029 = vmul.f32 1.0, %v1028
  %v1030 = vrcp.pop %v826
  %v1031 = vmul.f32 %v826, %v1030
  %v1032 = vsub.f32 1.0, %v1031
  %v1033 = vmul.f32 %v1030, %v1032
  %v1034 = vadd.f32 %v1030, %v1033
  %vm1035 = vweird.f32 %v826
  %vm1036 = vweird.f32 %v1030
  %vm1037 = vmor %vm1035, %vm1036
  %v1038 = vsel %vm1037, %v1030, %v1034
  %v1039 = vand.u32 2147483647, %v826
  %vm1040 = vcmp.eq.f32.partialorder %v1039, 8.507059e+37
  %v1041 = vand.u32 %v826, 2147483648
  %v1042 = vor.u32 1.1754944e-38, %v1041
  %v1043 = vsel %vm1040, %v1042, %v1038
  %v1044 = vmul.f32 1.0, %v1043
  %v1045 = vrcp.pop %v827
  %v1046 = vmul.f32 %v827, %v1045
  %v1047 = vsub.f32 1.0, %v1046
  %v1048 = vmul.f32 %v1045, %v1047
  %v1049 = vadd.f32 %v1045, %v1048
  %vm1050 = vweird.f32 %v827
  %vm1051 = vweird.f32 %v1045
  %vm1052 = vmor %vm1050, %vm1051
  %v1053 = vsel %vm1052, %v1045, %v1049
  %v1054 = vand.u32 2147483647, %v827
  %vm1055 = vcmp.eq.f32.partialorder %v1054, 8.507059e+37
  %v1056 = vand.u32 %v827, 2147483648
  %v1057 = vor.u32 1.1754944e-38, %v1056
  %v1058 = vsel %vm1055, %v1057, %v1053
  %v1059 = vmul.f32 1.0, %v1058
  %v1060 = vrcp.pop %v828
  %v1061 = vmul.f32 %v828, %v1060
  %v1062 = vsub.f32 1.0, %v1061
  %v1063 = vmul.f32 %v1060, %v1062
  %v1064 = vadd.f32 %v1060, %v1063
  %vm1065 = vweird.f32 %v828
  %vm1066 = vweird.f32 %v1060
  %vm1067 = vmor %vm1065, %vm1066
  %v1068 = vsel %vm1067, %v1060, %v1064
  %v1069 = vand.u32 2147483647, %v828
  %vm1070 = vcmp.eq.f32.partialorder %v1069, 8.507059e+37
  %v1071 = vand.u32 %v828, 2147483648
  %v1072 = vor.u32 1.1754944e-38, %v1071
  %v1073 = vsel %vm1070, %v1072, %v1068
  %v1074 = vmul.f32 1.0, %v1073
  %v1075 = vrcp.pop %v829
  %v1076 = vmul.f32 %v829, %v1075
  %v1077 = vsub.f32 1.0, %v1076
  %v1078 = vmul.f32 %v1075, %v1077
  %v1079 = vadd.f32 %v1075, %v1078
  %vm1080 = vweird.f32 %v829
  %vm1081 = vweird.f32 %v1075
  %vm1082 = vmor %vm1080, %vm1081
  %v1083 = vsel %vm1082, %v1075, %v1079
  %v1084 = vand.u32 2147483647, %v829
  %vm1085 = vcmp.eq.f32.partialorder %v1084, 8.507059e+37
  %v1086 = vand.u32 %v829, 2147483648
  %v1087 = vor.u32 1.1754944e-38, %v1086
  %v1088 = vsel %vm1085, %v1087, %v1083
  %v1089 = vmul.f32 1.0, %v1088
  %v1090 = vrcp.pop %v830
  %v1091 = vmul.f32 %v830, %v1090
  %v1092 = vsub.f32 1.0, %v1091
  %v1093 = vmul.f32 %v1090, %v1092
  %v1094 = vadd.f32 %v1090, %v1093
  %vm1095 = vweird.f32 %v830
  %vm1096 = vweird.f32 %v1090
  %vm1097 = vmor %vm1095, %vm1096
  %v1098 = vsel %vm1097, %v1090, %v1094
  %v1099 = vand.u32 2147483647, %v830
  %vm1100 = vcmp.eq.f32.partialorder %v1099, 8.507059e+37
  %v1101 = vand.u32 %v830, 2147483648
  %v1102 = vor.u32 1.1754944e-38, %v1101
  %v1103 = vsel %vm1100, %v1102, %v1098
  %v1104 = vmul.f32 1.0, %v1103
  %v1105 = vrcp.pop %v831
  %v1106 = vmul.f32 %v831, %v1105
  %v1107 = vsub.f32 1.0, %v1106
  %v1108 = vmul.f32 %v1105, %v1107
  %v1109 = vadd.f32 %v1105, %v1108
  %vm1110 = vweird.f32 %v831
  %vm1111 = vweird.f32 %v1105
  %vm1112 = vmor %vm1110, %vm1111
  %v1113 = vsel %vm1112, %v1105, %v1109
  %v1114 = vand.u32 2147483647, %v831
  %vm1115 = vcmp.eq.f32.partialorder %v1114, 8.507059e+37
  %v1116 = vand.u32 %v831, 2147483648
  %v1117 = vor.u32 1.1754944e-38, %v1116
  %v1118 = vsel %vm1115, %v1117, %v1113
  %v1119 = vmul.f32 1.0, %v1118
  %v1120 = vrcp.pop %v832
  %v1121 = vmul.f32 %v832, %v1120
  %v1122 = vsub.f32 1.0, %v1121
  %v1123 = vmul.f32 %v1120, %v1122
  %v1124 = vadd.f32 %v1120, %v1123
  %vm1125 = vweird.f32 %v832
  %vm1126 = vweird.f32 %v1120
  %vm1127 = vmor %vm1125, %vm1126
  %v1128 = vsel %vm1127, %v1120, %v1124
  %v1129 = vand.u32 2147483647, %v832
  %vm1130 = vcmp.eq.f32.partialorder %v1129, 8.507059e+37
  %v1131 = vand.u32 %v832, 2147483648
  %v1132 = vor.u32 1.1754944e-38, %v1131
  %v1133 = vsel %vm1130, %v1132, %v1128
  %v1134 = vmul.f32 1.0, %v1133
  %v1135 = vrcp.pop %v833
  %v1136 = vmul.f32 %v833, %v1135
  %v1137 = vsub.f32 1.0, %v1136
  %v1138 = vmul.f32 %v1135, %v1137
  %v1139 = vadd.f32 %v1135, %v1138
  %vm1140 = vweird.f32 %v833
  %vm1141 = vweird.f32 %v1135
  %vm1142 = vmor %vm1140, %vm1141
  %v1143 = vsel %vm1142, %v1135, %v1139
  %v1144 = vand.u32 2147483647, %v833
  %vm1145 = vcmp.eq.f32.partialorder %v1144, 8.507059e+37
  %v1146 = vand.u32 %v833, 2147483648
  %v1147 = vor.u32 1.1754944e-38, %v1146
  %v1148 = vsel %vm1145, %v1147, %v1143
  %v1149 = vmul.f32 1.0, %v1148
  %v1150 = vrcp.pop %v834
  %v1151 = vmul.f32 %v834, %v1150
  %v1152 = vsub.f32 1.0, %v1151
  %v1153 = vmul.f32 %v1150, %v1152
  %v1154 = vadd.f32 %v1150, %v1153
  %vm1155 = vweird.f32 %v834
  %vm1156 = vweird.f32 %v1150
  %vm1157 = vmor %vm1155, %vm1156
  %v1158 = vsel %vm1157, %v1150, %v1154
  %v1159 = vand.u32 2147483647, %v834
  %vm1160 = vcmp.eq.f32.partialorder %v1159, 8.507059e+37
  %v1161 = vand.u32 %v834, 2147483648
  %v1162 = vor.u32 1.1754944e-38, %v1161
  %v1163 = vsel %vm1160, %v1162, %v1158
  %v1164 = vmul.f32 1.0, %v1163
  %v1165 = vrcp.pop %v835
  %v1166 = vmul.f32 %v835, %v1165
  %v1167 = vsub.f32 1.0, %v1166
  %v1168 = vmul.f32 %v1165, %v1167
  %v1169 = vadd.f32 %v1165, %v1168
  %vm1170 = vweird.f32 %v835
  %vm1171 = vweird.f32 %v1165
  %vm1172 = vmor %vm1170, %vm1171
  %v1173 = vsel %vm1172, %v1165, %v1169
  %v1174 = vand.u32 2147483647, %v835
  %vm1175 = vcmp.eq.f32.partialorder %v1174, 8.507059e+37
  %v1176 = vand.u32 %v835, 2147483648
  %v1177 = vor.u32 1.1754944e-38, %v1176
  %v1178 = vsel %vm1175, %v1177, %v1173
  %v1179 = vmul.f32 1.0, %v1178
  %v1180 = vrcp.pop %v836
  %v1181 = vmul.f32 %v836, %v1180
  %v1182 = vsub.f32 1.0, %v1181
  %v1183 = vmul.f32 %v1180, %v1182
  %v1184 = vadd.f32 %v1180, %v1183
  %vm1185 = vweird.f32 %v836
  %vm1186 = vweird.f32 %v1180
  %vm1187 = vmor %vm1185, %vm1186
  %v1188 = vsel %vm1187, %v1180, %v1184
  %v1189 = vand.u32 2147483647, %v836
  %vm1190 = vcmp.eq.f32.partialorder %v1189, 8.507059e+37
  %v1191 = vand.u32 %v836, 2147483648
  %v1192 = vor.u32 1.1754944e-38, %v1191
  %v1193 = vsel %vm1190, %v1192, %v1188
  %v1194 = vmul.f32 1.0, %v1193
  %v1195 = vrcp.pop %v837
  %v1196 = vmul.f32 %v837, %v1195
  %v1197 = vsub.f32 1.0, %v1196
  %v1198 = vmul.f32 %v1195, %v1197
  %v1199 = vadd.f32 %v1195, %v1198
  %vm1200 = vweird.f32 %v837
  %vm1201 = vweird.f32 %v1195
  %vm1202 = vmor %vm1200, %vm1201
  %v1203 = vsel %vm1202, %v1195, %v1199
  %v1204 = vand.u32 2147483647, %v837
  %vm1205 = vcmp.eq.f32.partialorder %v1204, 8.507059e+37
  %v1206 = vand.u32 %v837, 2147483648
  %v1207 = vor.u32 1.1754944e-38, %v1206
  %v1208 = vsel %vm1205, %v1207, %v1203
  %v1209 = vmul.f32 1.0, %v1208
  %v1210 = vrcp.pop %v838
  %v1211 = vmul.f32 %v838, %v1210
  %v1212 = vsub.f32 1.0, %v1211
  %v1213 = vmul.f32 %v1210, %v1212
  %v1214 = vadd.f32 %v1210, %v1213
  %vm1215 = vweird.f32 %v838
  %vm1216 = vweird.f32 %v1210
  %vm1217 = vmor %vm1215, %vm1216
  %v1218 = vsel %vm1217, %v1210, %v1214
  %v1219 = vand.u32 2147483647, %v838
  %vm1220 = vcmp.eq.f32.partialorder %v1219, 8.507059e+37
  %v1221 = vand.u32 %v838, 2147483648
  %v1222 = vor.u32 1.1754944e-38, %v1221
  %v1223 = vsel %vm1220, %v1222, %v1218
  %v1224 = vmul.f32 1.0, %v1223
  %v1225 = vrcp.pop %v839
  %v1226 = vmul.f32 %v839, %v1225
  %v1227 = vsub.f32 1.0, %v1226
  %v1228 = vmul.f32 %v1225, %v1227
  %v1229 = vadd.f32 %v1225, %v1228
  %vm1230 = vweird.f32 %v839
  %vm1231 = vweird.f32 %v1225
  %vm1232 = vmor %vm1230, %vm1231
  %v1233 = vsel %vm1232, %v1225, %v1229
  %v1234 = vand.u32 2147483647, %v839
  %vm1235 = vcmp.eq.f32.partialorder %v1234, 8.507059e+37
  %v1236 = vand.u32 %v839, 2147483648
  %v1237 = vor.u32 1.1754944e-38, %v1236
  %v1238 = vsel %vm1235, %v1237, %v1233
  %v1239 = vmul.f32 1.0, %v1238
  %v1240 = vrcp.pop %v840
  %v1241 = vmul.f32 %v840, %v1240
  %v1242 = vsub.f32 1.0, %v1241
  %v1243 = vmul.f32 %v1240, %v1242
  %v1244 = vadd.f32 %v1240, %v1243
  %vm1245 = vweird.f32 %v840
  %vm1246 = vweird.f32 %v1240
  %vm1247 = vmor %vm1245, %vm1246
  %v1248 = vsel %vm1247, %v1240, %v1244
  %v1249 = vand.u32 2147483647, %v840
  %vm1250 = vcmp.eq.f32.partialorder %v1249, 8.507059e+37
  %v1251 = vand.u32 %v840, 2147483648
  %v1252 = vor.u32 1.1754944e-38, %v1251
  %v1253 = vsel %vm1250, %v1252, %v1248
  %v1254 = vmul.f32 1.0, %v1253
  %v1255 = vrcp.pop %v841
  %v1256 = vmul.f32 %v841, %v1255
  %v1257 = vsub.f32 1.0, %v1256
  %v1258 = vmul.f32 %v1255, %v1257
  %v1259 = vadd.f32 %v1255, %v1258
  %vm1260 = vweird.f32 %v841
  %vm1261 = vweird.f32 %v1255
  %vm1262 = vmor %vm1260, %vm1261
  %v1263 = vsel %vm1262, %v1255, %v1259
  %v1264 = vand.u32 2147483647, %v841
  %vm1265 = vcmp.eq.f32.partialorder %v1264, 8.507059e+37
  %v1266 = vand.u32 %v841, 2147483648
  %v1267 = vor.u32 1.1754944e-38, %v1266
  %v1268 = vsel %vm1265, %v1267, %v1263
  %v1269 = vmul.f32 1.0, %v1268
  %v1270 = vrcp.pop %v842
  %v1271 = vmul.f32 %v842, %v1270
  %v1272 = vsub.f32 1.0, %v1271
  %v1273 = vmul.f32 %v1270, %v1272
  %v1274 = vadd.f32 %v1270, %v1273
  %vm1275 = vweird.f32 %v842
  %vm1276 = vweird.f32 %v1270
  %vm1277 = vmor %vm1275, %vm1276
  %v1278 = vsel %vm1277, %v1270, %v1274
  %v1279 = vand.u32 2147483647, %v842
  %vm1280 = vcmp.eq.f32.partialorder %v1279, 8.507059e+37
  %v1281 = vand.u32 %v842, 2147483648
  %v1282 = vor.u32 1.1754944e-38, %v1281
  %v1283 = vsel %vm1280, %v1282, %v1278
  %v1284 = vmul.f32 1.0, %v1283
  %v1285 = vrcp.pop %v843
  %v1286 = vmul.f32 %v843, %v1285
  %v1287 = vsub.f32 1.0, %v1286
  %v1288 = vmul.f32 %v1285, %v1287
  %v1289 = vadd.f32 %v1285, %v1288
  %vm1290 = vweird.f32 %v843
  %vm1291 = vweird.f32 %v1285
  %vm1292 = vmor %vm1290, %vm1291
  %v1293 = vsel %vm1292, %v1285, %v1289
  %v1294 = vand.u32 2147483647, %v843
  %vm1295 = vcmp.eq.f32.partialorder %v1294, 8.507059e+37
  %v1296 = vand.u32 %v843, 2147483648
  %v1297 = vor.u32 1.1754944e-38, %v1296
  %v1298 = vsel %vm1295, %v1297, %v1293
  %v1299 = vmul.f32 1.0, %v1298
  %v1300 = vrcp.pop %v844
  %v1301 = vmul.f32 %v844, %v1300
  %v1302 = vsub.f32 1.0, %v1301
  %v1303 = vmul.f32 %v1300, %v1302
  %v1304 = vadd.f32 %v1300, %v1303
  %vm1305 = vweird.f32 %v844
  %vm1306 = vweird.f32 %v1300
  %vm1307 = vmor %vm1305, %vm1306
  %v1308 = vsel %vm1307, %v1300, %v1304
  %v1309 = vand.u32 2147483647, %v844
  %vm1310 = vcmp.eq.f32.partialorder %v1309, 8.507059e+37
  %v1311 = vand.u32 %v844, 2147483648
  %v1312 = vor.u32 1.1754944e-38, %v1311
  %v1313 = vsel %vm1310, %v1312, %v1308
  %v1314 = vmul.f32 1.0, %v1313
  %v1315 = vrcp.pop %v845
  %v1316 = vmul.f32 %v845, %v1315
  %v1317 = vsub.f32 1.0, %v1316
  %v1318 = vmul.f32 %v1315, %v1317
  %v1319 = vadd.f32 %v1315, %v1318
  %vm1320 = vweird.f32 %v845
  %vm1321 = vweird.f32 %v1315
  %vm1322 = vmor %vm1320, %vm1321
  %v1323 = vsel %vm1322, %v1315, %v1319
  %v1324 = vand.u32 2147483647, %v845
  %vm1325 = vcmp.eq.f32.partialorder %v1324, 8.507059e+37
  %v1326 = vand.u32 %v845, 2147483648
  %v1327 = vor.u32 1.1754944e-38, %v1326
  %v1328 = vsel %vm1325, %v1327, %v1323
  %v1329 = vmul.f32 1.0, %v1328
  %v1330 = vrcp.pop %v846
  %v1331 = vmul.f32 %v846, %v1330
  %v1332 = vsub.f32 1.0, %v1331
  %v1333 = vmul.f32 %v1330, %v1332
  %v1334 = vadd.f32 %v1330, %v1333
  %vm1335 = vweird.f32 %v846
  %vm1336 = vweird.f32 %v1330
  %vm1337 = vmor %vm1335, %vm1336
  %v1338 = vsel %vm1337, %v1330, %v1334
  %v1339 = vand.u32 2147483647, %v846
  %vm1340 = vcmp.eq.f32.partialorder %v1339, 8.507059e+37
  %v1341 = vand.u32 %v846, 2147483648
  %v1342 = vor.u32 1.1754944e-38, %v1341
  %v1343 = vsel %vm1340, %v1342, %v1338
  %v1344 = vmul.f32 1.0, %v1343
  %v1345 = vrcp.pop %v847
  %v1346 = vmul.f32 %v847, %v1345
  %v1347 = vsub.f32 1.0, %v1346
  %v1348 = vmul.f32 %v1345, %v1347
  %v1349 = vadd.f32 %v1345, %v1348
  %vm1350 = vweird.f32 %v847
  %vm1351 = vweird.f32 %v1345
  %vm1352 = vmor %vm1350, %vm1351
  %v1353 = vsel %vm1352, %v1345, %v1349
  %v1354 = vand.u32 2147483647, %v847
  %vm1355 = vcmp.eq.f32.partialorder %v1354, 8.507059e+37
  %v1356 = vand.u32 %v847, 2147483648
  %v1357 = vor.u32 1.1754944e-38, %v1356
  %v1358 = vsel %vm1355, %v1357, %v1353
  %v1359 = vmul.f32 1.0, %v1358
  %v1360 = vrcp.pop %v848
  %v1361 = vmul.f32 %v848, %v1360
  %v1362 = vsub.f32 1.0, %v1361
  %v1363 = vmul.f32 %v1360, %v1362
  %v1364 = vadd.f32 %v1360, %v1363
  %vm1365 = vweird.f32 %v848
  %vm1366 = vweird.f32 %v1360
  %vm1367 = vmor %vm1365, %vm1366
  %v1368 = vsel %vm1367, %v1360, %v1364
  %v1369 = vand.u32 2147483647, %v848
  %vm1370 = vcmp.eq.f32.partialorder %v1369, 8.507059e+37
  %v1371 = vand.u32 %v848, 2147483648
  %v1372 = vor.u32 1.1754944e-38, %v1371
  %v1373 = vsel %vm1370, %v1372, %v1368
  %v1374 = vmul.f32 1.0, %v1373
  %v1375 = vrcp.pop %v849
  %v1376 = vmul.f32 %v849, %v1375
  %v1377 = vsub.f32 1.0, %v1376
  %v1378 = vmul.f32 %v1375, %v1377
  %v1379 = vadd.f32 %v1375, %v1378
  %vm1380 = vweird.f32 %v849
  %vm1381 = vweird.f32 %v1375
  %vm1382 = vmor %vm1380, %vm1381
  %v1383 = vsel %vm1382, %v1375, %v1379
  %v1384 = vand.u32 2147483647, %v849
  %vm1385 = vcmp.eq.f32.partialorder %v1384, 8.507059e+37
  %v1386 = vand.u32 %v849, 2147483648
  %v1387 = vor.u32 1.1754944e-38, %v1386
  %v1388 = vsel %vm1385, %v1387, %v1383
  %v1389 = vmul.f32 1.0, %v1388
  %v1390 = vrcp.pop %v850
  %v1391 = vmul.f32 %v850, %v1390
  %v1392 = vsub.f32 1.0, %v1391
  %v1393 = vmul.f32 %v1390, %v1392
  %v1394 = vadd.f32 %v1390, %v1393
  %vm1395 = vweird.f32 %v850
  %vm1396 = vweird.f32 %v1390
  %vm1397 = vmor %vm1395, %vm1396
  %v1398 = vsel %vm1397, %v1390, %v1394
  %v1399 = vand.u32 2147483647, %v850
  %vm1400 = vcmp.eq.f32.partialorder %v1399, 8.507059e+37
  %v1401 = vand.u32 %v850, 2147483648
  %v1402 = vor.u32 1.1754944e-38, %v1401
  %v1403 = vsel %vm1400, %v1402, %v1398
  %v1404 = vmul.f32 1.0, %v1403
  %v1405 = vrcp.pop %v851
  %v1406 = vmul.f32 %v851, %v1405
  %v1407 = vsub.f32 1.0, %v1406
  %v1408 = vmul.f32 %v1405, %v1407
  %v1409 = vadd.f32 %v1405, %v1408
  %vm1410 = vweird.f32 %v851
  %vm1411 = vweird.f32 %v1405
  %vm1412 = vmor %vm1410, %vm1411
  %v1413 = vsel %vm1412, %v1405, %v1409
  %v1414 = vand.u32 2147483647, %v851
  %vm1415 = vcmp.eq.f32.partialorder %v1414, 8.507059e+37
  %v1416 = vand.u32 %v851, 2147483648
  %v1417 = vor.u32 1.1754944e-38, %v1416
  %v1418 = vsel %vm1415, %v1417, %v1413
  %v1419 = vmul.f32 1.0, %v1418
  %v1420 = vrcp.pop %v852
  %v1421 = vmul.f32 %v852, %v1420
  %v1422 = vsub.f32 1.0, %v1421
  %v1423 = vmul.f32 %v1420, %v1422
  %v1424 = vadd.f32 %v1420, %v1423
  %vm1425 = vweird.f32 %v852
  %vm1426 = vweird.f32 %v1420
  %vm1427 = vmor %vm1425, %vm1426
  %v1428 = vsel %vm1427, %v1420, %v1424
  %v1429 = vand.u32 2147483647, %v852
  %vm1430 = vcmp.eq.f32.partialorder %v1429, 8.507059e+37
  %v1431 = vand.u32 %v852, 2147483648
  %v1432 = vor.u32 1.1754944e-38, %v1431
  %v1433 = vsel %vm1430, %v1432, %v1428
  %v1434 = vmul.f32 1.0, %v1433
  %v1435 = vrcp.pop %v853
  %v1436 = vmul.f32 %v853, %v1435
  %v1437 = vsub.f32 1.0, %v1436
  %v1438 = vmul.f32 %v1435, %v1437
  %v1439 = vadd.f32 %v1435, %v1438
  %vm1440 = vweird.f32 %v853
  %vm1441 = vweird.f32 %v1435
  %vm1442 = vmor %vm1440, %vm1441
  %v1443 = vsel %vm1442, %v1435, %v1439
  %v1444 = vand.u32 2147483647, %v853
  %vm1445 = vcmp.eq.f32.partialorder %v1444, 8.507059e+37
  %v1446 = vand.u32 %v853, 2147483648
  %v1447 = vor.u32 1.1754944e-38, %v1446
  %v1448 = vsel %vm1445, %v1447, %v1443
  %v1449 = vmul.f32 1.0, %v1448
  %v1450 = vrcp.pop %v854
  %v1451 = vmul.f32 %v854, %v1450
  %v1452 = vsub.f32 1.0, %v1451
  %v1453 = vmul.f32 %v1450, %v1452
  %v1454 = vadd.f32 %v1450, %v1453
  %vm1455 = vweird.f32 %v854
  %vm1456 = vweird.f32 %v1450
  %vm1457 = vmor %vm1455, %vm1456
  %v1458 = vsel %vm1457, %v1450, %v1454
  %v1459 = vand.u32 2147483647, %v854
  %vm1460 = vcmp.eq.f32.partialorder %v1459, 8.507059e+37
  %v1461 = vand.u32 %v854, 2147483648
  %v1462 = vor.u32 1.1754944e-38, %v1461
  %v1463 = vsel %vm1460, %v1462, %v1458
  %v1464 = vmul.f32 1.0, %v1463
  %v1465 = vrcp.pop %v855
  %v1466 = vmul.f32 %v855, %v1465
  %v1467 = vsub.f32 1.0, %v1466
  %v1468 = vmul.f32 %v1465, %v1467
  %v1469 = vadd.f32 %v1465, %v1468
  %vm1470 = vweird.f32 %v855
  %vm1471 = vweird.f32 %v1465
  %vm1472 = vmor %vm1470, %vm1471
  %v1473 = vsel %vm1472, %v1465, %v1469
  %v1474 = vand.u32 2147483647, %v855
  %vm1475 = vcmp.eq.f32.partialorder %v1474, 8.507059e+37
  %v1476 = vand.u32 %v855, 2147483648
  %v1477 = vor.u32 1.1754944e-38, %v1476
  %v1478 = vsel %vm1475, %v1477, %v1473
  %v1479 = vmul.f32 1.0, %v1478
  %v1480 = vrcp.pop %v856
  %v1481 = vmul.f32 %v856, %v1480
  %v1482 = vsub.f32 1.0, %v1481
  %v1483 = vmul.f32 %v1480, %v1482
  %v1484 = vadd.f32 %v1480, %v1483
  %vm1485 = vweird.f32 %v856
  %vm1486 = vweird.f32 %v1480
  %vm1487 = vmor %vm1485, %vm1486
  %v1488 = vsel %vm1487, %v1480, %v1484
  %v1489 = vand.u32 2147483647, %v856
  %vm1490 = vcmp.eq.f32.partialorder %v1489, 8.507059e+37
  %v1491 = vand.u32 %v856, 2147483648
  %v1492 = vor.u32 1.1754944e-38, %v1491
  %v1493 = vsel %vm1490, %v1492, %v1488
  %v1494 = vmul.f32 1.0, %v1493
  %v1495 = vrcp.pop %v857
  %v1496 = vmul.f32 %v857, %v1495
  %v1497 = vsub.f32 1.0, %v1496
  %v1498 = vmul.f32 %v1495, %v1497
  %v1499 = vadd.f32 %v1495, %v1498
  %vm1500 = vweird.f32 %v857
  %vm1501 = vweird.f32 %v1495
  %vm1502 = vmor %vm1500, %vm1501
  %v1503 = vsel %vm1502, %v1495, %v1499
  %v1504 = vand.u32 2147483647, %v857
  %vm1505 = vcmp.eq.f32.partialorder %v1504, 8.507059e+37
  %v1506 = vand.u32 %v857, 2147483648
  %v1507 = vor.u32 1.1754944e-38, %v1506
  %v1508 = vsel %vm1505, %v1507, %v1503
  %v1509 = vmul.f32 1.0, %v1508
  %v1510 = vrcp.pop %v858
  %v1511 = vmul.f32 %v858, %v1510
  %v1512 = vsub.f32 1.0, %v1511
  %v1513 = vmul.f32 %v1510, %v1512
  %v1514 = vadd.f32 %v1510, %v1513
  %vm1515 = vweird.f32 %v858
  %vm1516 = vweird.f32 %v1510
  %vm1517 = vmor %vm1515, %vm1516
  %v1518 = vsel %vm1517, %v1510, %v1514
  %v1519 = vand.u32 2147483647, %v858
  %vm1520 = vcmp.eq.f32.partialorder %v1519, 8.507059e+37
  %v1521 = vand.u32 %v858, 2147483648
  %v1522 = vor.u32 1.1754944e-38, %v1521
  %v1523 = vsel %vm1520, %v1522, %v1518
  %v1524 = vmul.f32 1.0, %v1523
  %v1525 = vrcp.pop %v859
  %v1526 = vmul.f32 %v859, %v1525
  %v1527 = vsub.f32 1.0, %v1526
  %v1528 = vmul.f32 %v1525, %v1527
  %v1529 = vadd.f32 %v1525, %v1528
  %vm1530 = vweird.f32 %v859
  %vm1531 = vweird.f32 %v1525
  %vm1532 = vmor %vm1530, %vm1531
  %v1533 = vsel %vm1532, %v1525, %v1529
  %v1534 = vand.u32 2147483647, %v859
  %vm1535 = vcmp.eq.f32.partialorder %v1534, 8.507059e+37
  %v1536 = vand.u32 %v859, 2147483648
  %v1537 = vor.u32 1.1754944e-38, %v1536
  %v1538 = vsel %vm1535, %v1537, %v1533
  %v1539 = vmul.f32 1.0, %v1538
  %v1540 = vrcp.pop %v860
  %v1541 = vmul.f32 %v860, %v1540
  %v1542 = vsub.f32 1.0, %v1541
  %v1543 = vmul.f32 %v1540, %v1542
  %v1544 = vadd.f32 %v1540, %v1543
  %vm1545 = vweird.f32 %v860
  %vm1546 = vweird.f32 %v1540
  %vm1547 = vmor %vm1545, %vm1546
  %v1548 = vsel %vm1547, %v1540, %v1544
  %v1549 = vand.u32 2147483647, %v860
  %vm1550 = vcmp.eq.f32.partialorder %v1549, 8.507059e+37
  %v1551 = vand.u32 %v860, 2147483648
  %v1552 = vor.u32 1.1754944e-38, %v1551
  %v1553 = vsel %vm1550, %v1552, %v1548
  %v1554 = vmul.f32 1.0, %v1553
  %v1555 = vrcp.pop %v861
  %v1556 = vmul.f32 %v861, %v1555
  %v1557 = vsub.f32 1.0, %v1556
  %v1558 = vmul.f32 %v1555, %v1557
  %v1559 = vadd.f32 %v1555, %v1558
  %vm1560 = vweird.f32 %v861
  %vm1561 = vweird.f32 %v1555
  %vm1562 = vmor %vm1560, %vm1561
  %v1563 = vsel %vm1562, %v1555, %v1559
  %v1564 = vand.u32 2147483647, %v861
  %vm1565 = vcmp.eq.f32.partialorder %v1564, 8.507059e+37
  %v1566 = vand.u32 %v861, 2147483648
  %v1567 = vor.u32 1.1754944e-38, %v1566
  %v1568 = vsel %vm1565, %v1567, %v1563
  %v1569 = vmul.f32 1.0, %v1568
  %v1570 = vrcp.pop %v862
  %v1571 = vmul.f32 %v862, %v1570
  %v1572 = vsub.f32 1.0, %v1571
  %v1573 = vmul.f32 %v1570, %v1572
  %v1574 = vadd.f32 %v1570, %v1573
  %vm1575 = vweird.f32 %v862
  %vm1576 = vweird.f32 %v1570
  %vm1577 = vmor %vm1575, %vm1576
  %v1578 = vsel %vm1577, %v1570, %v1574
  %v1579 = vand.u32 2147483647, %v862
  %vm1580 = vcmp.eq.f32.partialorder %v1579, 8.507059e+37
  %v1581 = vand.u32 %v862, 2147483648
  %v1582 = vor.u32 1.1754944e-38, %v1581
  %v1583 = vsel %vm1580, %v1582, %v1578
  %v1584 = vmul.f32 1.0, %v1583
  %v1585 = vrcp.pop %v863
  %v1586 = vmul.f32 %v863, %v1585
  %v1587 = vsub.f32 1.0, %v1586
  %v1588 = vmul.f32 %v1585, %v1587
  %v1589 = vadd.f32 %v1585, %v1588
  %vm1590 = vweird.f32 %v863
  %vm1591 = vweird.f32 %v1585
  %vm1592 = vmor %vm1590, %vm1591
  %v1593 = vsel %vm1592, %v1585, %v1589
  %v1594 = vand.u32 2147483647, %v863
  %vm1595 = vcmp.eq.f32.partialorder %v1594, 8.507059e+37
  %v1596 = vand.u32 %v863, 2147483648
  %v1597 = vor.u32 1.1754944e-38, %v1596
  %v1598 = vsel %vm1595, %v1597, %v1593
  %v1599 = vmul.f32 1.0, %v1598
  %v1600 = vrcp.pop %v864
  %v1601 = vmul.f32 %v864, %v1600
  %v1602 = vsub.f32 1.0, %v1601
  %v1603 = vmul.f32 %v1600, %v1602
  %v1604 = vadd.f32 %v1600, %v1603
  %vm1605 = vweird.f32 %v864
  %vm1606 = vweird.f32 %v1600
  %vm1607 = vmor %vm1605, %vm1606
  %v1608 = vsel %vm1607, %v1600, %v1604
  %v1609 = vand.u32 2147483647, %v864
  %vm1610 = vcmp.eq.f32.partialorder %v1609, 8.507059e+37
  %v1611 = vand.u32 %v864, 2147483648
  %v1612 = vor.u32 1.1754944e-38, %v1611
  %v1613 = vsel %vm1610, %v1612, %v1608
  %v1614 = vmul.f32 1.0, %v1613
  %v1615 = vrcp.pop %v865
  %v1616 = vmul.f32 %v865, %v1615
  %v1617 = vsub.f32 1.0, %v1616
  %v1618 = vmul.f32 %v1615, %v1617
  %v1619 = vadd.f32 %v1615, %v1618
  %vm1620 = vweird.f32 %v865
  %vm1621 = vweird.f32 %v1615
  %vm1622 = vmor %vm1620, %vm1621
  %v1623 = vsel %vm1622, %v1615, %v1619
  %v1624 = vand.u32 2147483647, %v865
  %vm1625 = vcmp.eq.f32.partialorder %v1624, 8.507059e+37
  %v1626 = vand.u32 %v865, 2147483648
  %v1627 = vor.u32 1.1754944e-38, %v1626
  %v1628 = vsel %vm1625, %v1627, %v1623
  %v1629 = vmul.f32 1.0, %v1628
  %v1630 = vrcp.pop %v866
  %v1631 = vmul.f32 %v866, %v1630
  %v1632 = vsub.f32 1.0, %v1631
  %v1633 = vmul.f32 %v1630, %v1632
  %v1634 = vadd.f32 %v1630, %v1633
  %vm1635 = vweird.f32 %v866
  %vm1636 = vweird.f32 %v1630
  %vm1637 = vmor %vm1635, %vm1636
  %v1638 = vsel %vm1637, %v1630, %v1634
  %v1639 = vand.u32 2147483647, %v866
  %vm1640 = vcmp.eq.f32.partialorder %v1639, 8.507059e+37
  %v1641 = vand.u32 %v866, 2147483648
  %v1642 = vor.u32 1.1754944e-38, %v1641
  %v1643 = vsel %vm1640, %v1642, %v1638
  %v1644 = vmul.f32 1.0, %v1643
  %v1645 = vrcp.pop %v867
  %v1646 = vmul.f32 %v867, %v1645
  %v1647 = vsub.f32 1.0, %v1646
  %v1648 = vmul.f32 %v1645, %v1647
  %v1649 = vadd.f32 %v1645, %v1648
  %vm1650 = vweird.f32 %v867
  %vm1651 = vweird.f32 %v1645
  %vm1652 = vmor %vm1650, %vm1651
  %v1653 = vsel %vm1652, %v1645, %v1649
  %v1654 = vand.u32 2147483647, %v867
  %vm1655 = vcmp.eq.f32.partialorder %v1654, 8.507059e+37
  %v1656 = vand.u32 %v867, 2147483648
  %v1657 = vor.u32 1.1754944e-38, %v1656
  %v1658 = vsel %vm1655, %v1657, %v1653
  %v1659 = vmul.f32 1.0, %v1658
  %v1660 = vrcp.pop %v868
  %v1661 = vmul.f32 %v868, %v1660
  %v1662 = vsub.f32 1.0, %v1661
  %v1663 = vmul.f32 %v1660, %v1662
  %v1664 = vadd.f32 %v1660, %v1663
  %vm1665 = vweird.f32 %v868
  %vm1666 = vweird.f32 %v1660
  %vm1667 = vmor %vm1665, %vm1666
  %v1668 = vsel %vm1667, %v1660, %v1664
  %v1669 = vand.u32 2147483647, %v868
  %vm1670 = vcmp.eq.f32.partialorder %v1669, 8.507059e+37
  %v1671 = vand.u32 %v868, 2147483648
  %v1672 = vor.u32 1.1754944e-38, %v1671
  %v1673 = vsel %vm1670, %v1672, %v1668
  %v1674 = vmul.f32 1.0, %v1673
  %v1675 = vrcp.pop %v869
  %v1676 = vmul.f32 %v869, %v1675
  %v1677 = vsub.f32 1.0, %v1676
  %v1678 = vmul.f32 %v1675, %v1677
  %v1679 = vadd.f32 %v1675, %v1678
  %vm1680 = vweird.f32 %v869
  %vm1681 = vweird.f32 %v1675
  %vm1682 = vmor %vm1680, %vm1681
  %v1683 = vsel %vm1682, %v1675, %v1679
  %v1684 = vand.u32 2147483647, %v869
  %vm1685 = vcmp.eq.f32.partialorder %v1684, 8.507059e+37
  %v1686 = vand.u32 %v869, 2147483648
  %v1687 = vor.u32 1.1754944e-38, %v1686
  %v1688 = vsel %vm1685, %v1687, %v1683
  %v1689 = vmul.f32 1.0, %v1688
  %v1690 = vrcp.pop %v870
  %v1691 = vmul.f32 %v870, %v1690
  %v1692 = vsub.f32 1.0, %v1691
  %v1693 = vmul.f32 %v1690, %v1692
  %v1694 = vadd.f32 %v1690, %v1693
  %vm1695 = vweird.f32 %v870
  %vm1696 = vweird.f32 %v1690
  %vm1697 = vmor %vm1695, %vm1696
  %v1698 = vsel %vm1697, %v1690, %v1694
  %v1699 = vand.u32 2147483647, %v870
  %vm1700 = vcmp.eq.f32.partialorder %v1699, 8.507059e+37
  %v1701 = vand.u32 %v870, 2147483648
  %v1702 = vor.u32 1.1754944e-38, %v1701
  %v1703 = vsel %vm1700, %v1702, %v1698
  %v1704 = vmul.f32 1.0, %v1703
  %v1705 = vrcp.pop %v871
  %v1706 = vmul.f32 %v871, %v1705
  %v1707 = vsub.f32 1.0, %v1706
  %v1708 = vmul.f32 %v1705, %v1707
  %v1709 = vadd.f32 %v1705, %v1708
  %vm1710 = vweird.f32 %v871
  %vm1711 = vweird.f32 %v1705
  %vm1712 = vmor %vm1710, %vm1711
  %v1713 = vsel %vm1712, %v1705, %v1709
  %v1714 = vand.u32 2147483647, %v871
  %vm1715 = vcmp.eq.f32.partialorder %v1714, 8.507059e+37
  %v1716 = vand.u32 %v871, 2147483648
  %v1717 = vor.u32 1.1754944e-38, %v1716
  %v1718 = vsel %vm1715, %v1717, %v1713
  %v1719 = vmul.f32 1.0, %v1718
  %v1720 = vrcp.pop %v872
  %v1721 = vmul.f32 %v872, %v1720
  %v1722 = vsub.f32 1.0, %v1721
  %v1723 = vmul.f32 %v1720, %v1722
  %v1724 = vadd.f32 %v1720, %v1723
  %vm1725 = vweird.f32 %v872
  %vm1726 = vweird.f32 %v1720
  %vm1727 = vmor %vm1725, %vm1726
  %v1728 = vsel %vm1727, %v1720, %v1724
  %v1729 = vand.u32 2147483647, %v872
  %vm1730 = vcmp.eq.f32.partialorder %v1729, 8.507059e+37
  %v1731 = vand.u32 %v872, 2147483648
  %v1732 = vor.u32 1.1754944e-38, %v1731
  %v1733 = vsel %vm1730, %v1732, %v1728
  %v1734 = vmul.f32 1.0, %v1733
  %v1735 = vrcp.pop %v873
  %v1736 = vmul.f32 %v873, %v1735
  %v1737 = vsub.f32 1.0, %v1736
  %v1738 = vmul.f32 %v1735, %v1737
  %v1739 = vadd.f32 %v1735, %v1738
  %vm1740 = vweird.f32 %v873
  %vm1741 = vweird.f32 %v1735
  %vm1742 = vmor %vm1740, %vm1741
  %v1743 = vsel %vm1742, %v1735, %v1739
  %v1744 = vand.u32 2147483647, %v873
  %vm1745 = vcmp.eq.f32.partialorder %v1744, 8.507059e+37
  %v1746 = vand.u32 %v873, 2147483648
  %v1747 = vor.u32 1.1754944e-38, %v1746
  %v1748 = vsel %vm1745, %v1747, %v1743
  %v1749 = vmul.f32 1.0, %v1748
  %v1750 = vrcp.pop %v874
  %v1751 = vmul.f32 %v874, %v1750
  %v1752 = vsub.f32 1.0, %v1751
  %v1753 = vmul.f32 %v1750, %v1752
  %v1754 = vadd.f32 %v1750, %v1753
  %vm1755 = vweird.f32 %v874
  %vm1756 = vweird.f32 %v1750
  %vm1757 = vmor %vm1755, %vm1756
  %v1758 = vsel %vm1757, %v1750, %v1754
  %v1759 = vand.u32 2147483647, %v874
  %vm1760 = vcmp.eq.f32.partialorder %v1759, 8.507059e+37
  %v1761 = vand.u32 %v874, 2147483648
  %v1762 = vor.u32 1.1754944e-38, %v1761
  %v1763 = vsel %vm1760, %v1762, %v1758
  %v1764 = vmul.f32 1.0, %v1763
  %v1765 = vrcp.pop %v875
  %v1766 = vmul.f32 %v875, %v1765
  %v1767 = vsub.f32 1.0, %v1766
  %v1768 = vmul.f32 %v1765, %v1767
  %v1769 = vadd.f32 %v1765, %v1768
  %vm1770 = vweird.f32 %v875
  %vm1771 = vweird.f32 %v1765
  %vm1772 = vmor %vm1770, %vm1771
  %v1773 = vsel %vm1772, %v1765, %v1769
  %v1774 = vand.u32 2147483647, %v875
  %vm1775 = vcmp.eq.f32.partialorder %v1774, 8.507059e+37
  %v1776 = vand.u32 %v875, 2147483648
  %v1777 = vor.u32 1.1754944e-38, %v1776
  %v1778 = vsel %vm1775, %v1777, %v1773
  %v1779 = vmul.f32 1.0, %v1778
  %v1780 = vrcp.pop %v876
  %v1781 = vmul.f32 %v876, %v1780
  %v1782 = vsub.f32 1.0, %v1781
  %v1783 = vmul.f32 %v1780, %v1782
  %v1784 = vadd.f32 %v1780, %v1783
  %vm1785 = vweird.f32 %v876
  %vm1786 = vweird.f32 %v1780
  %vm1787 = vmor %vm1785, %vm1786
  %v1788 = vsel %vm1787, %v1780, %v1784
  %v1789 = vand.u32 2147483647, %v876
  %vm1790 = vcmp.eq.f32.partialorder %v1789, 8.507059e+37
  %v1791 = vand.u32 %v876, 2147483648
  %v1792 = vor.u32 1.1754944e-38, %v1791
  %v1793 = vsel %vm1790, %v1792, %v1788
  %v1794 = vmul.f32 1.0, %v1793
  %v1795 = vrcp.pop %v877
  %v1796 = vmul.f32 %v877, %v1795
  %v1797 = vsub.f32 1.0, %v1796
  %v1798 = vmul.f32 %v1795, %v1797
  %v1799 = vadd.f32 %v1795, %v1798
  %vm1800 = vweird.f32 %v877
  %vm1801 = vweird.f32 %v1795
  %vm1802 = vmor %vm1800, %vm1801
  %v1803 = vsel %vm1802, %v1795, %v1799
  %v1804 = vand.u32 2147483647, %v877
  %vm1805 = vcmp.eq.f32.partialorder %v1804, 8.507059e+37
  %v1806 = vand.u32 %v877, 2147483648
  %v1807 = vor.u32 1.1754944e-38, %v1806
  %v1808 = vsel %vm1805, %v1807, %v1803
  %v1809 = vmul.f32 1.0, %v1808
  %v1810 = vrcp.pop %v878
  %v1811 = vmul.f32 %v878, %v1810
  %v1812 = vsub.f32 1.0, %v1811
  %v1813 = vmul.f32 %v1810, %v1812
  %v1814 = vadd.f32 %v1810, %v1813
  %vm1815 = vweird.f32 %v878
  %vm1816 = vweird.f32 %v1810
  %vm1817 = vmor %vm1815, %vm1816
  %v1818 = vsel %vm1817, %v1810, %v1814
  %v1819 = vand.u32 2147483647, %v878
  %vm1820 = vcmp.eq.f32.partialorder %v1819, 8.507059e+37
  %v1821 = vand.u32 %v878, 2147483648
  %v1822 = vor.u32 1.1754944e-38, %v1821
  %v1823 = vsel %vm1820, %v1822, %v1818
  %v1824 = vmul.f32 1.0, %v1823
  %v1825 = vrcp.pop %v879
  %v1826 = vmul.f32 %v879, %v1825
  %v1827 = vsub.f32 1.0, %v1826
  %v1828 = vmul.f32 %v1825, %v1827
  %v1829 = vadd.f32 %v1825, %v1828
  %vm1830 = vweird.f32 %v879
  %vm1831 = vweird.f32 %v1825
  %vm1832 = vmor %vm1830, %vm1831
  %v1833 = vsel %vm1832, %v1825, %v1829
  %v1834 = vand.u32 2147483647, %v879
  %vm1835 = vcmp.eq.f32.partialorder %v1834, 8.507059e+37
  %v1836 = vand.u32 %v879, 2147483648
  %v1837 = vor.u32 1.1754944e-38, %v1836
  %v1838 = vsel %vm1835, %v1837, %v1833
  %v1839 = vmul.f32 1.0, %v1838
  %v1840 = vmul.f32 %v560, %v894
  %v1841 = vmul.f32 %v561, %v909
  %v1842 = vmul.f32 %v562, %v924
  %v1843 = vmul.f32 %v563, %v939
  %v1844 = vmul.f32 %v564, %v954
  %v1845 = vmul.f32 %v565, %v969
  %v1846 = vmul.f32 %v566, %v984
  %v1847 = vmul.f32 %v567, %v999
  %v1848 = vmul.f32 %v568, %v1014
  %v1849 = vmul.f32 %v569, %v1029
  %v1850 = vmul.f32 %v570, %v1044
  %v1851 = vmul.f32 %v571, %v1059
  %v1852 = vmul.f32 %v572, %v1074
  %v1853 = vmul.f32 %v573, %v1089
  %v1854 = vmul.f32 %v574, %v1104
  %v1855 = vmul.f32 %v575, %v1119
  %v1856 = vmul.f32 %v576, %v1134
  %v1857 = vmul.f32 %v577, %v1149
  %v1858 = vmul.f32 %v578, %v1164
  %v1859 = vmul.f32 %v579, %v1179
  %v1860 = vmul.f32 %v580, %v1194
  %v1861 = vmul.f32 %v581, %v1209
  %v1862 = vmul.f32 %v582, %v1224
  %v1863 = vmul.f32 %v583, %v1239
  %v1864 = vmul.f32 %v584, %v1254
  %v1865 = vmul.f32 %v585, %v1269
  %v1866 = vmul.f32 %v586, %v1284
  %v1867 = vmul.f32 %v587, %v1299
  %v1868 = vmul.f32 %v588, %v1314
  %v1869 = vmul.f32 %v589, %v1329
  %v1870 = vmul.f32 %v590, %v1344
  %v1871 = vmul.f32 %v591, %v1359
  %v1872 = vmul.f32 %v592, %v1374
  %v1873 = vmul.f32 %v593, %v1389
  %v1874 = vmul.f32 %v594, %v1404
  %v1875 = vmul.f32 %v595, %v1419
  %v1876 = vmul.f32 %v596, %v1434
  %v1877 = vmul.f32 %v597, %v1449
  %v1878 = vmul.f32 %v598, %v1464
  %v1879 = vmul.f32 %v599, %v1479
  %v1880 = vmul.f32 %v600, %v1494
  %v1881 = vmul.f32 %v601, %v1509
  %v1882 = vmul.f32 %v602, %v1524
  %v1883 = vmul.f32 %v603, %v1539
  %v1884 = vmul.f32 %v604, %v1554
  %v1885 = vmul.f32 %v605, %v1569
  %v1886 = vmul.f32 %v606, %v1584
  %v1887 = vmul.f32 %v607, %v1599
  %v1888 = vmul.f32 %v608, %v1614
  %v1889 = vmul.f32 %v609, %v1629
  %v1890 = vmul.f32 %v610, %v1644
  %v1891 = vmul.f32 %v611, %v1659
  %v1892 = vmul.f32 %v612, %v1674
  %v1893 = vmul.f32 %v613, %v1689
  %v1894 = vmul.f32 %v614, %v1704
  %v1895 = vmul.f32 %v615, %v1719
  %v1896 = vmul.f32 %v616, %v1734
  %v1897 = vmul.f32 %v617, %v1749
  %v1898 = vmul.f32 %v618, %v1764
  %v1899 = vmul.f32 %v619, %v1779
  %v1900 = vmul.f32 %v620, %v1794
  %v1901 = vmul.f32 %v621, %v1809
  %v1902 = vmul.f32 %v622, %v1824
  %v1903 = vmul.f32 %v623, %v1839
  %vm1904 = vcmask 15360
  %1905 = vst.msk [vmem:[%s4] sm:$0xff] %vm1904, %v1840
  %1906 = vst.msk [vmem:[%s4 + $0x8] sm:$0xff] %vm1904, %v1841
  %1907 = vst.msk [vmem:[%s4 + $0x10] sm:$0xff] %vm1904, %v1842
  %1908 = vst.msk [vmem:[%s4 + $0x18] sm:$0xff] %vm1904, %v1843
  %1909 = vst.msk [vmem:[%s4 + $0x20] sm:$0xff] %vm1904, %v1844
  %1910 = vst.msk [vmem:[%s4 + $0x28] sm:$0xff] %vm1904, %v1845
  %1911 = vst.msk [vmem:[%s4 + $0x30] sm:$0xff] %vm1904, %v1846
  %1912 = vst.msk [vmem:[%s4 + $0x38] sm:$0xff] %vm1904, %v1847
  %1913 = vst.msk [vmem:[%s4 + $0x40] sm:$0xff] %vm1904, %v1848
  %1914 = vst.msk [vmem:[%s4 + $0x48] sm:$0xff] %vm1904, %v1849
  %1915 = vst.msk [vmem:[%s4 + $0x50] sm:$0xff] %vm1904, %v1850
  %1916 = vst.msk [vmem:[%s4 + $0x58] sm:$0xff] %vm1904, %v1851
  %1917 = vst.msk [vmem:[%s4 + $0x60] sm:$0xff] %vm1904, %v1852
  %1918 = vst.msk [vmem:[%s4 + $0x68] sm:$0xff] %vm1904, %v1853
  %1919 = vst.msk [vmem:[%s4 + $0x70] sm:$0xff] %vm1904, %v1854
  %1920 = vst.msk [vmem:[%s4 + $0x78] sm:$0xff] %vm1904, %v1855
  %1921 = vst.msk [vmem:[%s4 + $0x80] sm:$0xff] %vm1904, %v1856
  %1922 = vst.msk [vmem:[%s4 + $0x88] sm:$0xff] %vm1904, %v1857
  %1923 = vst.msk [vmem:[%s4 + $0x90] sm:$0xff] %vm1904, %v1858
  %1924 = vst.msk [vmem:[%s4 + $0x98] sm:$0xff] %vm1904, %v1859
  %1925 = vst.msk [vmem:[%s4 + $0xa0] sm:$0xff] %vm1904, %v1860
  %1926 = vst.msk [vmem:[%s4 + $0xa8] sm:$0xff] %vm1904, %v1861
  %1927 = vst.msk [vmem:[%s4 + $0xb0] sm:$0xff] %vm1904, %v1862
  %1928 = vst.msk [vmem:[%s4 + $0xb8] sm:$0xff] %vm1904, %v1863
  %1929 = vst.msk [vmem:[%s4 + $0xc0] sm:$0xff] %vm1904, %v1864
  %1930 = vst.msk [vmem:[%s4 + $0xc8] sm:$0xff] %vm1904, %v1865
  %1931 = vst.msk [vmem:[%s4 + $0xd0] sm:$0xff] %vm1904, %v1866
  %1932 = vst.msk [vmem:[%s4 + $0xd8] sm:$0xff] %vm1904, %v1867
  %1933 = vst.msk [vmem:[%s4 + $0xe0] sm:$0xff] %vm1904, %v1868
  %1934 = vst.msk [vmem:[%s4 + $0xe8] sm:$0xff] %vm1904, %v1869
  %1935 = vst.msk [vmem:[%s4 + $0xf0] sm:$0xff] %vm1904, %v1870
  %1936 = vst.msk [vmem:[%s4 + $0xf8] sm:$0xff] %vm1904, %v1871
  %1937 = vst.msk [vmem:[%s4 + $0x100] sm:$0xff] %vm1904, %v1872
  %1938 = vst.msk [vmem:[%s4 + $0x108] sm:$0xff] %vm1904, %v1873
  %1939 = vst.msk [vmem:[%s4 + $0x110] sm:$0xff] %vm1904, %v1874
  %1940 = vst.msk [vmem:[%s4 + $0x118] sm:$0xff] %vm1904, %v1875
  %1941 = vst.msk [vmem:[%s4 + $0x120] sm:$0xff] %vm1904, %v1876
  %1942 = vst.msk [vmem:[%s4 + $0x128] sm:$0xff] %vm1904, %v1877
  %1943 = vst.msk [vmem:[%s4 + $0x130] sm:$0xff] %vm1904, %v1878
  %1944 = vst.msk [vmem:[%s4 + $0x138] sm:$0xff] %vm1904, %v1879
  %1945 = vst.msk [vmem:[%s4 + $0x140] sm:$0xff] %vm1904, %v1880
  %1946 = vst.msk [vmem:[%s4 + $0x148] sm:$0xff] %vm1904, %v1881
  %1947 = vst.msk [vmem:[%s4 + $0x150] sm:$0xff] %vm1904, %v1882
  %1948 = vst.msk [vmem:[%s4 + $0x158] sm:$0xff] %vm1904, %v1883
  %1949 = vst.msk [vmem:[%s4 + $0x160] sm:$0xff] %vm1904, %v1884
  %1950 = vst.msk [vmem:[%s4 + $0x168] sm:$0xff] %vm1904, %v1885
  %1951 = vst.msk [vmem:[%s4 + $0x170] sm:$0xff] %vm1904, %v1886
  %1952 = vst.msk [vmem:[%s4 + $0x178] sm:$0xff] %vm1904, %v1887
  %1953 = vst.msk [vmem:[%s4 + $0x180] sm:$0xff] %vm1904, %v1888
  %1954 = vst.msk [vmem:[%s4 + $0x188] sm:$0xff] %vm1904, %v1889
  %1955 = vst.msk [vmem:[%s4 + $0x190] sm:$0xff] %vm1904, %v1890
  %1956 = vst.msk [vmem:[%s4 + $0x198] sm:$0xff] %vm1904, %v1891
  %1957 = vst.msk [vmem:[%s4 + $0x1a0] sm:$0xff] %vm1904, %v1892
  %1958 = vst.msk [vmem:[%s4 + $0x1a8] sm:$0xff] %vm1904, %v1893
  %1959 = vst.msk [vmem:[%s4 + $0x1b0] sm:$0xff] %vm1904, %v1894
  %1960 = vst.msk [vmem:[%s4 + $0x1b8] sm:$0xff] %vm1904, %v1895
  %1961 = vst.msk [vmem:[%s4 + $0x1c0] sm:$0xff] %vm1904, %v1896
  %1962 = vst.msk [vmem:[%s4 + $0x1c8] sm:$0xff] %vm1904, %v1897
  %1963 = vst.msk [vmem:[%s4 + $0x1d0] sm:$0xff] %vm1904, %v1898
  %1964 = vst.msk [vmem:[%s4 + $0x1d8] sm:$0xff] %vm1904, %v1899
  %1965 = vst.msk [vmem:[%s4 + $0x1e0] sm:$0xff] %vm1904, %v1900
  %1966 = vst.msk [vmem:[%s4 + $0x1e8] sm:$0xff] %vm1904, %v1901
  %1967 = vst.msk [vmem:[%s4 + $0x1f0] sm:$0xff] %vm1904, %v1902
  %1968 = vst.msk [vmem:[%s4 + $0x1f8] sm:$0xff] %vm1904, %v1903
  // Predicated region
  $region18: #{tpu_custom_call.1} parent=0 // pred_check
    _
  $region19: #{tpu_custom_call.1} parent=0 // pred_check_branch
    %1970 = sbr.rel (0) target = $region21
  $region20: #{tpu_custom_call.1} parent=0 // pred_region
    _
  $region21: #{tpu_custom_call.1} parent=0 // pred_fallthru
    _
  // Predicated region
  $region22: #{tpu_custom_call.1} parent=0 // pred_check
    _
  $region23: #{tpu_custom_call.1} parent=0 // pred_check_branch
    %1972 = sbr.rel (0) target = $region25
  $region24: #{tpu_custom_call.1} parent=0 // pred_region
    _
  $region25: #{tpu_custom_call.1} parent=0 // pred_fallthru
    _

</llo_original>
